<compile_context>
chip_gen: v7x
topology: tpu7x:2x2x1
jax: 0.10.0
libtpu: 0.0.40
codegen_flags: <defaults>
</compile_context>

<pallas_src>
import functools

import jax
import jax.numpy as jnp
from jax.experimental import pallas as pl
from jax.experimental.pallas import tpu as pltpu

C_IN = 1
C_MID = 64
C_OUT = 2
KH = KW = 3


def _fused_conv_conv_tanh_kernel(x_ref, w1t_ref, b1_ref, w2t_ref, b2_ref,
                                 o_ref, t1_ref, *, H, W, PAD):
    # x_ref  : (1, 1, SW)        zero-padded flat image row, SW = PAD + H*W + PAD
    # w1t_ref: (C_MID, 9)        conv1 weights, (channel, tap)
    # b1_ref : (C_MID, 1)
    # w2t_ref: (9, C_OUT, C_MID) conv2 weights per tap, (tap, out_chan, in_chan)
    # b2_ref : (C_OUT, 1)
    # o_ref  : (1, C_OUT, H*W)   lane-dense output slab
    # t1_ref : (C_MID, SW)       lane-padded conv1 output scratch (chan x pixel)
    HW = H * W

    # Column-validity masks.  Only the w-boundary (row wrap in the flattened
    # pixel index) needs masking; the h-boundary always lands in the physical
    # zero padding of the flat row / scratch, which matches SAME zero padding.
    w_idx = jax.lax.broadcasted_iota(jnp.int32, (1, HW), 1) % W
    not_left = w_idx > 0          # valid columns for taps with dw == 0
    not_right = w_idx < W - 1     # valid columns for taps with dw == 2

    # ---- conv1: build the (9, HW) shifted-row patch, one (64,9)x(9,HW) matmul
    rows = []
    for dh in range(KH):
        for dw in range(KW):
            s = (dh - 1) * W + (dw - 1)
            r = x_ref[0, :, PAD + s:PAD + s + HW]        # (1, HW), static offset
            if dw == 0:
                r = jnp.where(not_left, r, 0.0)
            elif dw == 2:
                r = jnp.where(not_right, r, 0.0)
            rows.append(r)
    patch = jnp.concatenate(rows, axis=0)                # (9, HW)
    t1 = jnp.dot(w1t_ref[...], patch,
                 preferred_element_type=jnp.float32) + b1_ref[...]   # (64, HW)

    # ---- stage t1 into the lane-padded scratch (all stores 128-lane aligned)
    t1_ref[:, :PAD] = jnp.zeros((C_MID, PAD), jnp.float32)
    t1_ref[:, PAD + HW:] = jnp.zeros((C_MID, PAD), jnp.float32)
    t1_ref[:, PAD:PAD + HW] = t1

    # ---- conv2: nine accumulating (2,64)x(64,HW) matmuls, masked per dw, then
    # bias + tanh directly on the lane-dense (2, HW) layout.
    acc = jnp.zeros((C_OUT, HW), jnp.float32)
    for dw in range(KW):
        part = jnp.zeros((C_OUT, HW), jnp.float32)
        for dh in range(KH):
            s = (dh - 1) * W + (dw - 1)
            src = t1_ref[:, PAD + s:PAD + s + HW]        # (64, HW) window
            part = part + jnp.dot(w2t_ref[dh * KW + dw], src,
                                  preferred_element_type=jnp.float32)
        if dw == 0:
            part = jnp.where(not_left, part, 0.0)
        elif dw == 2:
            part = jnp.where(not_right, part, 0.0)
        acc = acc + part

    o_ref[0] = jnp.tanh(acc + b2_ref[...]).astype(o_ref.dtype)


@jax.jit
def model_tanh_pallas(x_nchw, w1, b1, w2, b2):
    """x_nchw: (N, 1, H, W) f32; w1: (3,3,1,64); w2: (3,3,64,2) (HWIO).
    Returns (N, 2, H, W) f32 (same semantics as the PyTorch module)."""
    N, cin, H, W = x_nchw.shape
    assert cin == C_IN
    HW = H * W
    PAD = pl.cdiv(W + 1, 128) * 128          # >= W+1 and 128-lane aligned
    SW = PAD + HW + PAD

    # ---- layout plumbing (cheap, no im2col amplification) ----
    xrow = x_nchw.reshape(N, 1, HW)
    xpad = jnp.pad(xrow, ((0, 0), (0, 0), (PAD, PAD)))          # (N, 1, SW)

    w1t = jnp.transpose(w1.reshape(KH * KW * C_IN, C_MID))      # (64, 9)
    b1c = b1.reshape(C_MID, 1)
    w2t = jnp.transpose(w2, (0, 1, 3, 2)).reshape(KH * KW, C_OUT, C_MID)
    b2c = b2.reshape(C_OUT, 1)

    kernel = functools.partial(_fused_conv_conv_tanh_kernel, H=H, W=W, PAD=PAD)

    out = pl.pallas_call(
        kernel,
        out_shape=jax.ShapeDtypeStruct((N, C_OUT, HW), jnp.float32),
        grid_spec=pltpu.PrefetchScalarGridSpec(
            num_scalar_prefetch=0,
            grid=(N,),
            in_specs=[
                pl.BlockSpec((1, 1, SW), lambda b: (b, 0, 0)),
                pl.BlockSpec((C_MID, KH * KW), lambda b: (0, 0)),
                pl.BlockSpec((C_MID, 1), lambda b: (0, 0)),
                pl.BlockSpec((KH * KW, C_OUT, C_MID), lambda b: (0, 0, 0)),
                pl.BlockSpec((C_OUT, 1), lambda b: (0, 0)),
            ],
            out_specs=pl.BlockSpec((1, C_OUT, HW), lambda b: (b, 0, 0)),
            scratch_shapes=[
                pltpu.VMEM((C_MID, SW), jnp.float32),
            ],
        ),
        compiler_params=pltpu.CompilerParams(
            dimension_semantics=("parallel",)),
    )(xpad, w1t, b1c, w2t, b2c)

    # (N, 2, H*W) -> (N, 2, H, W) == NCHW; pure reshape, no transpose needed.
    return out.reshape(N, C_OUT, H, W)


def _reference(x_nchw, w1, b1, w2, b2):
    """Pure-JAX reference (NHWC convs) for a correctness sanity check."""
    x = jnp.transpose(x_nchw, (0, 2, 3, 1))
    dn = ("NHWC", "HWIO", "NHWC")
    t1 = jax.lax.conv_general_dilated(x, w1, (1, 1), "SAME",
                                      dimension_numbers=dn) + b1
    t2 = jax.lax.conv_general_dilated(t1, w2, (1, 1), "SAME",
                                      dimension_numbers=dn) + b2
    return jnp.transpose(jnp.tanh(t2), (0, 3, 1, 2))


if __name__ == "__main__":
    key = jax.random.PRNGKey(0)
    k_x, k_w1, k_b1, k_w2, k_b2 = jax.random.split(key, 5)

    # Small deterministic shapes consistent with the module: N=2, Cin=1, 16x16.
    N, H, W = 2, 16, 16
    x = jax.random.normal(k_x, (N, C_IN, H, W), dtype=jnp.float32)

    # Deterministic synthetic parameters (HWIO layout), fan-in scaled.
    w1 = jax.random.normal(k_w1, (KH, KW, C_IN, C_MID), jnp.float32) * (
        1.0 / (KH * KW * C_IN) ** 0.5)
    b1 = jax.random.normal(k_b1, (C_MID,), jnp.float32) * 0.1
    w2 = jax.random.normal(k_w2, (KH, KW, C_MID, C_OUT), jnp.float32) * (
        1.0 / (KH * KW * C_MID) ** 0.5)
    b2 = jax.random.normal(k_b2, (C_OUT,), jnp.float32) * 0.1

    out = jax.block_until_ready(model_tanh_pallas(x, w1, b1, w2, b2))

    ref = _reference(x, w1, b1, w2, b2)
    assert out.shape == (N, C_OUT, H, W)
    assert jnp.allclose(out, ref, atol=2e-3, rtol=2e-3), "mismatch vs reference"

    print("KERNEL_OK")
</pallas_src>

<mosaic_0001>
module attributes {stable_mosaic.version = 11 : i64} {
  func.func @_fused_conv_conv_tanh_kernel(%arg0: i32, %arg1: memref<1x1x512xf32, #tpu.memory_space<vmem>>, %arg2: memref<64x9xf32, #tpu.memory_space<vmem>>, %arg3: memref<64x1xf32, #tpu.memory_space<vmem>>, %arg4: memref<9x2x64xf32, #tpu.memory_space<vmem>>, %arg5: memref<2x1xf32, #tpu.memory_space<vmem>>, %arg6: memref<1x2x256xf32, #tpu.memory_space<vmem>>, %arg7: memref<64x512xf32, #tpu.memory_space<vmem>>) attributes {dimension_semantics = [#tpu.dimension_semantics<parallel>], iteration_bounds = array<i64: 2>, scalar_prefetch = 0 : i64, scratch_operands = 1 : i64, tpu.core_type = #tpu.core_type<tc>, window_params = [{transform_indices = @transform_0, window_bounds = array<i64: 1, 1, 512>}, {pipeline_mode = #tpu.pipeline_mode<synchronous>, transform_indices = @transform_1, window_bounds = array<i64: 64, 9>}, {pipeline_mode = #tpu.pipeline_mode<synchronous>, transform_indices = @transform_2, window_bounds = array<i64: 64, 1>}, {pipeline_mode = #tpu.pipeline_mode<synchronous>, transform_indices = @transform_3, window_bounds = array<i64: 9, 2, 64>}, {pipeline_mode = #tpu.pipeline_mode<synchronous>, transform_indices = @transform_4, window_bounds = array<i64: 2, 1>}, {transform_indices = @transform_5, window_bounds = array<i64: 1, 2, 256>}]} {
    %0 = tpu.iota {dimensions = array<i32: 1>} : vector<1x256xi32>
    %c16_i32 = arith.constant 16 : i32
    %c0_i32 = arith.constant 0 : i32
    %1 = arith.cmpi eq, %c16_i32, %c0_i32 : i32
    %c1_i32 = arith.constant 1 : i32
    %2 = arith.select %1, %c1_i32, %c16_i32 : i32
    %3 = vector.broadcast %2 : i32 to vector<1x256xi32>
    %4 = arith.remsi %0, %3 : vector<1x256xi32>
    %c0_i32_0 = arith.constant 0 : i32
    %5 = vector.broadcast %c0_i32_0 : i32 to vector<1x256xi32>
    %6 = arith.cmpi ne, %4, %5 : vector<1x256xi32>
    %c0_i32_1 = arith.constant 0 : i32
    %7 = vector.broadcast %c0_i32_1 : i32 to vector<1x256xi32>
    %8 = arith.cmpi slt, %4, %7 : vector<1x256xi32>
    %c0_i32_2 = arith.constant 0 : i32
    %9 = arith.cmpi slt, %2, %c0_i32_2 : i32
    %10 = vector.broadcast %9 : i1 to vector<1x256xi1>
    %11 = vector.broadcast %10 : vector<1x256xi1> to vector<1x256xi1>
    %12 = arith.xori %8, %11 : vector<1x256xi1>
    %13 = arith.andi %12, %6 : vector<1x256xi1>
    %14 = vector.broadcast %2 : i32 to vector<1x256xi32>
    %15 = arith.addi %4, %14 : vector<1x256xi32>
    %16 = arith.select %13, %15, %4 : vector<1x256xi1>, vector<1x256xi32>
    %c0_i32_3 = arith.constant 0 : i32
    %17 = vector.broadcast %c0_i32_3 : i32 to vector<1x256xi32>
    %18 = arith.cmpi sgt, %16, %17 : vector<1x256xi32>
    %c15_i32 = arith.constant 15 : i32
    %19 = vector.broadcast %c15_i32 : i32 to vector<1x256xi32>
    %20 = arith.cmpi slt, %16, %19 : vector<1x256xi32>
    %c0 = arith.constant 0 : index
    %c0_4 = arith.constant 0 : index
    %c111 = arith.constant 111 : index
    %21 = vector.load %arg1[%c0, %c0_4, %c111] : memref<1x1x512xf32, #tpu.memory_space<vmem>>, vector<1x1x256xf32>
    %22 = vector.shape_cast %21 : vector<1x1x256xf32> to vector<1x256xf32>
    %cst = arith.constant 0.000000e+00 : f32
    %23 = vector.broadcast %cst : f32 to vector<1x256xf32>
    %24 = arith.select %18, %22, %23 : vector<1x256xi1>, vector<1x256xf32>
    %c0_5 = arith.constant 0 : index
    %c0_6 = arith.constant 0 : index
    %c112 = arith.constant 112 : index
    %25 = vector.load %arg1[%c0_5, %c0_6, %c112] : memref<1x1x512xf32, #tpu.memory_space<vmem>>, vector<1x1x256xf32>
    %26 = vector.shape_cast %25 : vector<1x1x256xf32> to vector<1x256xf32>
    %c0_7 = arith.constant 0 : index
    %c0_8 = arith.constant 0 : index
    %c113 = arith.constant 113 : index
    %27 = vector.load %arg1[%c0_7, %c0_8, %c113] : memref<1x1x512xf32, #tpu.memory_space<vmem>>, vector<1x1x256xf32>
    %28 = vector.shape_cast %27 : vector<1x1x256xf32> to vector<1x256xf32>
    %cst_9 = arith.constant 0.000000e+00 : f32
    %29 = vector.broadcast %cst_9 : f32 to vector<1x256xf32>
    %30 = arith.select %20, %28, %29 : vector<1x256xi1>, vector<1x256xf32>
    %c0_10 = arith.constant 0 : index
    %c0_11 = arith.constant 0 : index
    %c127 = arith.constant 127 : index
    %31 = vector.load %arg1[%c0_10, %c0_11, %c127] : memref<1x1x512xf32, #tpu.memory_space<vmem>>, vector<1x1x256xf32>
    %32 = vector.shape_cast %31 : vector<1x1x256xf32> to vector<1x256xf32>
    %cst_12 = arith.constant 0.000000e+00 : f32
    %33 = vector.broadcast %cst_12 : f32 to vector<1x256xf32>
    %34 = arith.select %18, %32, %33 : vector<1x256xi1>, vector<1x256xf32>
    %c0_13 = arith.constant 0 : index
    %c0_14 = arith.constant 0 : index
    %c128 = arith.constant 128 : index
    %35 = vector.load %arg1[%c0_13, %c0_14, %c128] : memref<1x1x512xf32, #tpu.memory_space<vmem>>, vector<1x1x256xf32>
    %36 = vector.shape_cast %35 : vector<1x1x256xf32> to vector<1x256xf32>
    %c0_15 = arith.constant 0 : index
    %c0_16 = arith.constant 0 : index
    %c129 = arith.constant 129 : index
    %37 = vector.load %arg1[%c0_15, %c0_16, %c129] : memref<1x1x512xf32, #tpu.memory_space<vmem>>, vector<1x1x256xf32>
    %38 = vector.shape_cast %37 : vector<1x1x256xf32> to vector<1x256xf32>
    %cst_17 = arith.constant 0.000000e+00 : f32
    %39 = vector.broadcast %cst_17 : f32 to vector<1x256xf32>
    %40 = arith.select %20, %38, %39 : vector<1x256xi1>, vector<1x256xf32>
    %c0_18 = arith.constant 0 : index
    %c0_19 = arith.constant 0 : index
    %c143 = arith.constant 143 : index
    %41 = vector.load %arg1[%c0_18, %c0_19, %c143] : memref<1x1x512xf32, #tpu.memory_space<vmem>>, vector<1x1x256xf32>
    %42 = vector.shape_cast %41 : vector<1x1x256xf32> to vector<1x256xf32>
    %cst_20 = arith.constant 0.000000e+00 : f32
    %43 = vector.broadcast %cst_20 : f32 to vector<1x256xf32>
    %44 = arith.select %18, %42, %43 : vector<1x256xi1>, vector<1x256xf32>
    %c0_21 = arith.constant 0 : index
    %c0_22 = arith.constant 0 : index
    %c144 = arith.constant 144 : index
    %45 = vector.load %arg1[%c0_21, %c0_22, %c144] : memref<1x1x512xf32, #tpu.memory_space<vmem>>, vector<1x1x256xf32>
    %46 = vector.shape_cast %45 : vector<1x1x256xf32> to vector<1x256xf32>
    %c0_23 = arith.constant 0 : index
    %c0_24 = arith.constant 0 : index
    %c145 = arith.constant 145 : index
    %47 = vector.load %arg1[%c0_23, %c0_24, %c145] : memref<1x1x512xf32, #tpu.memory_space<vmem>>, vector<1x1x256xf32>
    %48 = vector.shape_cast %47 : vector<1x1x256xf32> to vector<1x256xf32>
    %cst_25 = arith.constant 0.000000e+00 : f32
    %49 = vector.broadcast %cst_25 : f32 to vector<1x256xf32>
    %50 = arith.select %20, %48, %49 : vector<1x256xi1>, vector<1x256xf32>
    %51 = tpu.concatenate %24, %26, %30, %34, %36, %40, %44, %46, %50 in 0 : vector<1x256xf32>, vector<1x256xf32>, vector<1x256xf32>, vector<1x256xf32>, vector<1x256xf32>, vector<1x256xf32>, vector<1x256xf32>, vector<1x256xf32>, vector<1x256xf32> -> vector<9x256xf32>
    %c0_26 = arith.constant 0 : index
    %c0_27 = arith.constant 0 : index
    %52 = vector.load %arg2[%c0_26, %c0_27] : memref<64x9xf32, #tpu.memory_space<vmem>>, vector<64x9xf32>
    %cst_28 = arith.constant dense<0.000000e+00> : vector<64x256xf32>
    %53 = tpu.matmul %52, %51, %cst_28 {dimension_numbers = #tpu.dot_dimension_numbers<[1], [0], [0], [1], [0, 0, 1, 1], [], []>} : vector<64x9xf32>, vector<9x256xf32>, vector<64x256xf32> -> vector<64x256xf32>
    %c0_29 = arith.constant 0 : index
    %c0_30 = arith.constant 0 : index
    %54 = vector.load %arg3[%c0_29, %c0_30] : memref<64x1xf32, #tpu.memory_space<vmem>>, vector<64x1xf32>
    %55 = vector.broadcast %54 : vector<64x1xf32> to vector<64x256xf32>
    %56 = arith.addf %53, %55 : vector<64x256xf32>
    %cst_31 = arith.constant 0.000000e+00 : f32
    %57 = vector.broadcast %cst_31 : f32 to vector<64x128xf32>
    %c0_32 = arith.constant 0 : index
    %c0_33 = arith.constant 0 : index
    %58 = vector.load %arg7[%c0_32, %c0_33] : memref<64x512xf32, #tpu.memory_space<vmem>>, vector<64x128xf32>
    tpu.vector_store %arg7[%c0_32, %c0_33], %57 {strides = array<i32>} : memref<64x512xf32, #tpu.memory_space<vmem>>, vector<64x128xf32>,
    %cst_34 = arith.constant 0.000000e+00 : f32
    %59 = vector.broadcast %cst_34 : f32 to vector<64x128xf32>
    %c0_35 = arith.constant 0 : index
    %c384 = arith.constant 384 : index
    %60 = vector.load %arg7[%c0_35, %c384] : memref<64x512xf32, #tpu.memory_space<vmem>>, vector<64x128xf32>
    tpu.vector_store %arg7[%c0_35, %c384], %59 {strides = array<i32>} : memref<64x512xf32, #tpu.memory_space<vmem>>, vector<64x128xf32>,
    %c0_36 = arith.constant 0 : index
    %c128_37 = arith.constant 128 : index
    %61 = vector.load %arg7[%c0_36, %c128_37] : memref<64x512xf32, #tpu.memory_space<vmem>>, vector<64x256xf32>
    tpu.vector_store %arg7[%c0_36, %c128_37], %56 {strides = array<i32>} : memref<64x512xf32, #tpu.memory_space<vmem>>, vector<64x256xf32>,
    %cst_38 = arith.constant 0.000000e+00 : f32
    %62 = vector.broadcast %cst_38 : f32 to vector<2x256xf32>
    %cst_39 = arith.constant 0.000000e+00 : f32
    %63 = vector.broadcast %cst_39 : f32 to vector<2x256xf32>
    %c0_40 = arith.constant 0 : index
    %c111_41 = arith.constant 111 : index
    %64 = vector.load %arg7[%c0_40, %c111_41] : memref<64x512xf32, #tpu.memory_space<vmem>>, vector<64x256xf32>
    %c0_42 = arith.constant 0 : index
    %c0_43 = arith.constant 0 : index
    %c0_44 = arith.constant 0 : index
    %65 = vector.load %arg4[%c0_42, %c0_43, %c0_44] : memref<9x2x64xf32, #tpu.memory_space<vmem>>, vector<1x2x64xf32>
    %66 = vector.shape_cast %65 : vector<1x2x64xf32> to vector<2x64xf32>
    %cst_45 = arith.constant dense<0.000000e+00> : vector<2x256xf32>
    %67 = tpu.matmul %66, %64, %cst_45 {dimension_numbers = #tpu.dot_dimension_numbers<[1], [0], [0], [1], [0, 0, 1, 1], [], []>} : vector<2x64xf32>, vector<64x256xf32>, vector<2x256xf32> -> vector<2x256xf32>
    %68 = arith.addf %63, %67 : vector<2x256xf32>
    %c0_46 = arith.constant 0 : index
    %c127_47 = arith.constant 127 : index
    %69 = vector.load %arg7[%c0_46, %c127_47] : memref<64x512xf32, #tpu.memory_space<vmem>>, vector<64x256xf32>
    %c3 = arith.constant 3 : index
    %c0_48 = arith.constant 0 : index
    %c0_49 = arith.constant 0 : index
    %70 = vector.load %arg4[%c3, %c0_48, %c0_49] : memref<9x2x64xf32, #tpu.memory_space<vmem>>, vector<1x2x64xf32>
    %71 = vector.shape_cast %70 : vector<1x2x64xf32> to vector<2x64xf32>
    %cst_50 = arith.constant dense<0.000000e+00> : vector<2x256xf32>
    %72 = tpu.matmul %71, %69, %cst_50 {dimension_numbers = #tpu.dot_dimension_numbers<[1], [0], [0], [1], [0, 0, 1, 1], [], []>} : vector<2x64xf32>, vector<64x256xf32>, vector<2x256xf32> -> vector<2x256xf32>
    %73 = arith.addf %68, %72 : vector<2x256xf32>
    %c0_51 = arith.constant 0 : index
    %c143_52 = arith.constant 143 : index
    %74 = vector.load %arg7[%c0_51, %c143_52] : memref<64x512xf32, #tpu.memory_space<vmem>>, vector<64x256xf32>
    %c6 = arith.constant 6 : index
    %c0_53 = arith.constant 0 : index
    %c0_54 = arith.constant 0 : index
    %75 = vector.load %arg4[%c6, %c0_53, %c0_54] : memref<9x2x64xf32, #tpu.memory_space<vmem>>, vector<1x2x64xf32>
    %76 = vector.shape_cast %75 : vector<1x2x64xf32> to vector<2x64xf32>
    %cst_55 = arith.constant dense<0.000000e+00> : vector<2x256xf32>
    %77 = tpu.matmul %76, %74, %cst_55 {dimension_numbers = #tpu.dot_dimension_numbers<[1], [0], [0], [1], [0, 0, 1, 1], [], []>} : vector<2x64xf32>, vector<64x256xf32>, vector<2x256xf32> -> vector<2x256xf32>
    %78 = arith.addf %73, %77 : vector<2x256xf32>
    %cst_56 = arith.constant 0.000000e+00 : f32
    %79 = vector.shape_cast %18 : vector<1x256xi1> to vector<1x256xi1>
    %80 = vector.broadcast %79 : vector<1x256xi1> to vector<2x256xi1>
    %81 = vector.broadcast %cst_56 : f32 to vector<2x256xf32>
    %82 = arith.select %80, %78, %81 : vector<2x256xi1>, vector<2x256xf32>
    %83 = arith.addf %62, %82 : vector<2x256xf32>
    %cst_57 = arith.constant 0.000000e+00 : f32
    %84 = vector.broadcast %cst_57 : f32 to vector<2x256xf32>
    %c0_58 = arith.constant 0 : index
    %c112_59 = arith.constant 112 : index
    %85 = vector.load %arg7[%c0_58, %c112_59] : memref<64x512xf32, #tpu.memory_space<vmem>>, vector<64x256xf32>
    %c1 = arith.constant 1 : index
    %c0_60 = arith.constant 0 : index
    %c0_61 = arith.constant 0 : index
    %86 = vector.load %arg4[%c1, %c0_60, %c0_61] : memref<9x2x64xf32, #tpu.memory_space<vmem>>, vector<1x2x64xf32>
    %87 = vector.shape_cast %86 : vector<1x2x64xf32> to vector<2x64xf32>
    %cst_62 = arith.constant dense<0.000000e+00> : vector<2x256xf32>
    %88 = tpu.matmul %87, %85, %cst_62 {dimension_numbers = #tpu.dot_dimension_numbers<[1], [0], [0], [1], [0, 0, 1, 1], [], []>} : vector<2x64xf32>, vector<64x256xf32>, vector<2x256xf32> -> vector<2x256xf32>
    %89 = arith.addf %84, %88 : vector<2x256xf32>
    %c0_63 = arith.constant 0 : index
    %c128_64 = arith.constant 128 : index
    %90 = vector.load %arg7[%c0_63, %c128_64] : memref<64x512xf32, #tpu.memory_space<vmem>>, vector<64x256xf32>
    %c4 = arith.constant 4 : index
    %c0_65 = arith.constant 0 : index
    %c0_66 = arith.constant 0 : index
    %91 = vector.load %arg4[%c4, %c0_65, %c0_66] : memref<9x2x64xf32, #tpu.memory_space<vmem>>, vector<1x2x64xf32>
    %92 = vector.shape_cast %91 : vector<1x2x64xf32> to vector<2x64xf32>
    %cst_67 = arith.constant dense<0.000000e+00> : vector<2x256xf32>
    %93 = tpu.matmul %92, %90, %cst_67 {dimension_numbers = #tpu.dot_dimension_numbers<[1], [0], [0], [1], [0, 0, 1, 1], [], []>} : vector<2x64xf32>, vector<64x256xf32>, vector<2x256xf32> -> vector<2x256xf32>
    %94 = arith.addf %89, %93 : vector<2x256xf32>
    %c0_68 = arith.constant 0 : index
    %c144_69 = arith.constant 144 : index
    %95 = vector.load %arg7[%c0_68, %c144_69] : memref<64x512xf32, #tpu.memory_space<vmem>>, vector<64x256xf32>
    %c7 = arith.constant 7 : index
    %c0_70 = arith.constant 0 : index
    %c0_71 = arith.constant 0 : index
    %96 = vector.load %arg4[%c7, %c0_70, %c0_71] : memref<9x2x64xf32, #tpu.memory_space<vmem>>, vector<1x2x64xf32>
    %97 = vector.shape_cast %96 : vector<1x2x64xf32> to vector<2x64xf32>
    %cst_72 = arith.constant dense<0.000000e+00> : vector<2x256xf32>
    %98 = tpu.matmul %97, %95, %cst_72 {dimension_numbers = #tpu.dot_dimension_numbers<[1], [0], [0], [1], [0, 0, 1, 1], [], []>} : vector<2x64xf32>, vector<64x256xf32>, vector<2x256xf32> -> vector<2x256xf32>
    %99 = arith.addf %94, %98 : vector<2x256xf32>
    %100 = arith.addf %83, %99 : vector<2x256xf32>
    %cst_73 = arith.constant 0.000000e+00 : f32
    %101 = vector.broadcast %cst_73 : f32 to vector<2x256xf32>
    %c0_74 = arith.constant 0 : index
    %c113_75 = arith.constant 113 : index
    %102 = vector.load %arg7[%c0_74, %c113_75] : memref<64x512xf32, #tpu.memory_space<vmem>>, vector<64x256xf32>
    %c2 = arith.constant 2 : index
    %c0_76 = arith.constant 0 : index
    %c0_77 = arith.constant 0 : index
    %103 = vector.load %arg4[%c2, %c0_76, %c0_77] : memref<9x2x64xf32, #tpu.memory_space<vmem>>, vector<1x2x64xf32>
    %104 = vector.shape_cast %103 : vector<1x2x64xf32> to vector<2x64xf32>
    %cst_78 = arith.constant dense<0.000000e+00> : vector<2x256xf32>
    %105 = tpu.matmul %104, %102, %cst_78 {dimension_numbers = #tpu.dot_dimension_numbers<[1], [0], [0], [1], [0, 0, 1, 1], [], []>} : vector<2x64xf32>, vector<64x256xf32>, vector<2x256xf32> -> vector<2x256xf32>
    %106 = arith.addf %101, %105 : vector<2x256xf32>
    %c0_79 = arith.constant 0 : index
    %c129_80 = arith.constant 129 : index
    %107 = vector.load %arg7[%c0_79, %c129_80] : memref<64x512xf32, #tpu.memory_space<vmem>>, vector<64x256xf32>
    %c5 = arith.constant 5 : index
    %c0_81 = arith.constant 0 : index
    %c0_82 = arith.constant 0 : index
    %108 = vector.load %arg4[%c5, %c0_81, %c0_82] : memref<9x2x64xf32, #tpu.memory_space<vmem>>, vector<1x2x64xf32>
    %109 = vector.shape_cast %108 : vector<1x2x64xf32> to vector<2x64xf32>
    %cst_83 = arith.constant dense<0.000000e+00> : vector<2x256xf32>
    %110 = tpu.matmul %109, %107, %cst_83 {dimension_numbers = #tpu.dot_dimension_numbers<[1], [0], [0], [1], [0, 0, 1, 1], [], []>} : vector<2x64xf32>, vector<64x256xf32>, vector<2x256xf32> -> vector<2x256xf32>
    %111 = arith.addf %106, %110 : vector<2x256xf32>
    %c0_84 = arith.constant 0 : index
    %c145_85 = arith.constant 145 : index
    %112 = vector.load %arg7[%c0_84, %c145_85] : memref<64x512xf32, #tpu.memory_space<vmem>>, vector<64x256xf32>
    %c8 = arith.constant 8 : index
    %c0_86 = arith.constant 0 : index
    %c0_87 = arith.constant 0 : index
    %113 = vector.load %arg4[%c8, %c0_86, %c0_87] : memref<9x2x64xf32, #tpu.memory_space<vmem>>, vector<1x2x64xf32>
    %114 = vector.shape_cast %113 : vector<1x2x64xf32> to vector<2x64xf32>
    %cst_88 = arith.constant dense<0.000000e+00> : vector<2x256xf32>
    %115 = tpu.matmul %114, %112, %cst_88 {dimension_numbers = #tpu.dot_dimension_numbers<[1], [0], [0], [1], [0, 0, 1, 1], [], []>} : vector<2x64xf32>, vector<64x256xf32>, vector<2x256xf32> -> vector<2x256xf32>
    %116 = arith.addf %111, %115 : vector<2x256xf32>
    %cst_89 = arith.constant 0.000000e+00 : f32
    %117 = vector.shape_cast %20 : vector<1x256xi1> to vector<1x256xi1>
    %118 = vector.broadcast %117 : vector<1x256xi1> to vector<2x256xi1>
    %119 = vector.broadcast %cst_89 : f32 to vector<2x256xf32>
    %120 = arith.select %118, %116, %119 : vector<2x256xi1>, vector<2x256xf32>
    %121 = arith.addf %100, %120 : vector<2x256xf32>
    %c0_90 = arith.constant 0 : index
    %c0_91 = arith.constant 0 : index
    %122 = vector.load %arg5[%c0_90, %c0_91] : memref<2x1xf32, #tpu.memory_space<vmem>>, vector<2x1xf32>
    %123 = vector.broadcast %122 : vector<2x1xf32> to vector<2x256xf32>
    %124 = arith.addf %121, %123 : vector<2x256xf32>
    %125 = math.tanh %124 : vector<2x256xf32>
    %c0_92 = arith.constant 0 : index
    %c0_93 = arith.constant 0 : index
    %c0_94 = arith.constant 0 : index
    %126 = vector.load %arg6[%c0_92, %c0_93, %c0_94] : memref<1x2x256xf32, #tpu.memory_space<vmem>>, vector<1x2x256xf32>
    %127 = vector.shape_cast %126 : vector<1x2x256xf32> to vector<2x256xf32>
    %128 = vector.shape_cast %125 : vector<2x256xf32> to vector<1x2x256xf32>
    tpu.vector_store %arg6[%c0_92, %c0_93, %c0_94], %128 {strides = array<i32>} : memref<1x2x256xf32, #tpu.memory_space<vmem>>, vector<1x2x256xf32>,
    return
  }
  func.func @transform_0(%arg0: i32) -> (i32, i32, i32) {
    %c0_i32 = arith.constant 0 : i32
    %c0_i32_0 = arith.constant 0 : i32
    %c0_i32_1 = arith.constant 0 : i32
    return %arg0, %c0_i32, %c0_i32_0 : i32, i32, i32
  }
  func.func @transform_1(%arg0: i32) -> (i32, i32) {
    %c0_i32 = arith.constant 0 : i32
    %c0_i32_0 = arith.constant 0 : i32
    %c0_i32_1 = arith.constant 0 : i32
    return %c0_i32, %c0_i32_0 : i32, i32
  }
  func.func @transform_2(%arg0: i32) -> (i32, i32) {
    %c0_i32 = arith.constant 0 : i32
    %c0_i32_0 = arith.constant 0 : i32
    %c0_i32_1 = arith.constant 0 : i32
    return %c0_i32, %c0_i32_0 : i32, i32
  }
  func.func @transform_3(%arg0: i32) -> (i32, i32, i32) {
    %c0_i32 = arith.constant 0 : i32
    %c0_i32_0 = arith.constant 0 : i32
    %c0_i32_1 = arith.constant 0 : i32
    %c0_i32_2 = arith.constant 0 : i32
    return %c0_i32, %c0_i32_0, %c0_i32_1 : i32, i32, i32
  }
  func.func @transform_4(%arg0: i32) -> (i32, i32) {
    %c0_i32 = arith.constant 0 : i32
    %c0_i32_0 = arith.constant 0 : i32
    %c0_i32_1 = arith.constant 0 : i32
    return %c0_i32, %c0_i32_0 : i32, i32
  }
  func.func @transform_5(%arg0: i32) -> (i32, i32, i32) {
    %c0_i32 = arith.constant 0 : i32
    %c0_i32_0 = arith.constant 0 : i32
    %c0_i32_1 = arith.constant 0 : i32
    return %arg0, %c0_i32, %c0_i32_0 : i32, i32, i32
  }
}

</mosaic_0001>

<llo_original>
// kernel: model_tanh_pallas.1
$region0: #{model_tanh_pallas.1}
  #allocation0 [shape = 'u32[]', space=smem, size = 0x4, offset = 0x4, fixed_abs, tag = 'smem constant byte address 0x4 - core index']
  #allocation1 [shape = 'u32[144,128]{1,0:T(1,128)}', space=vmem, size = 0x12000, scoped, tag = 'internal scratch']
  #allocation2 [shape = 'f32[64,512]{1,0:T(8,128)}', space=vmem, size = 0x20000, scoped, tag = 'scratch operand']
  %s0 = inlined_call_operand.vmem [shape: f32[2,1,512], index: 0, kind: input, shape index: {}]
  %s1 = inlined_call_operand.vmem [shape: f32[64,9], index: 1, kind: input, shape index: {}]
  %s2 = inlined_call_operand.vmem [shape: f32[64,1], index: 2, kind: input, shape index: {}]
  %s3 = inlined_call_operand.vmem [shape: f32[9,2,64], index: 3, kind: input, shape index: {}]
  %s4 = inlined_call_operand.vmem [shape: f32[2,1], index: 4, kind: input, shape index: {}]
  %s5 = inlined_call_operand.vmem [shape: f32[2,2,256], index: 5, kind: output, shape index: {}]
  %s6 = sld [smem:[#allocation0]]
  $region53: #{model_tanh_pallas.1} parent=0
    _
  %s8 = ssub.s32 1, %s6
  %s9 = scalar_select 0, %s8, %s6
  loop: start=0, step=1, limit=4
  $region2: #{model_tanh_pallas.1} parent=0 // loop_pre_header
    _
  $region3: #{model_tanh_pallas.1} parent=0 // loop_header
    %s11 = sphi 0, %s15
    %p12 = scmp.ge.s32.totalorder %s11, 4
    %s21 = sphi 0, %s23
    %s24 = sphi 0, %s21
    %s25 = sphi 0, %s24
    %s41 = sphi 0, %s25
    %s45 = sphi 0, %s45
    %s47 = sphi 0, %s45
    %s48 = sphi 0, %s47
    %s62 = sphi 0, %s48
    %s66 = sphi 0, %s66
    %s68 = sphi 0, %s66
    %s69 = sphi 0, %s68
    %s83 = sphi 0, %s69
    %s87 = sphi 0, %s87
    %s89 = sphi 0, %s87
    %s90 = sphi 0, %s89
    %s104 = sphi 0, %s90
    %s108 = sphi 0, %s108
    %s110 = sphi 0, %s108
    %s111 = sphi 0, %s110
    %s125 = sphi 0, %s111
    %s131 = sphi 0, %s133
    %s134 = sphi 0, %s131
    %s135 = sphi 0, %s134
    %s151 = sphi 0, %s135
  $region4: #{model_tanh_pallas.1} parent=0 // loop_header_branch
    %14 = sbr.rel (%p12) target = $region8
  $region5: #{model_tanh_pallas.1} parent=0 // loop_body
    %s16 = ssub.s32 %s11, 1
    %s17 = ssub.s32 %s11, 2
    %s18 = sadd.s32 %s11, 1
    %s19 = ssub.s32 %s11, %s18
    %p20 = scmp.eq.s32.totalorder %s19, 0
    %s22 = sadd.s32 %s21, 1
    %s23 = scalar_select %p20, %s21, %s22
    %p26 = pneg %p20
    %p27 = scmp.eq.s32.totalorder %s11, 1
    %p28 = por %p26, %p27
    %p29 = scmp.ne.s32.totalorder %s21, %s24
    %p30 = scmp.eq.s32.totalorder %s11, 0
    %p31 = por %p29, %p30
    %p32 = scmp.ne.s32.totalorder %s21, %s24
    %p33 = scmp.eq.s32.totalorder %s16, 1
    %p34 = por %p32, %p33
    %p35 = scmp.ne.s32.totalorder %s24, %s25
    %p36 = scmp.eq.s32.totalorder %s16, 0
    %p37 = por %p35, %p36
    %p38 = scmp.ne.s32.totalorder %s24, %s25
    %p39 = scmp.eq.s32.totalorder %s17, 1
    %p40 = por %p38, %p39
    %p42 = scmp.ne.s32.totalorder %s25, %s41
    %p43 = scmp.eq.s32.totalorder %s17, 0
    %p44 = por %p42, %p43
    %s46 = sadd.s32 %s45, 1
    %p49 = scmp.eq.s32.totalorder %s11, 1
    %p50 = scmp.ne.s32.totalorder %s45, %s47
    %p51 = scmp.eq.s32.totalorder %s11, 0
    %p52 = por %p50, %p51
    %p53 = scmp.ne.s32.totalorder %s45, %s47
    %p54 = scmp.eq.s32.totalorder %s16, 1
    %p55 = por %p53, %p54
    %p56 = scmp.ne.s32.totalorder %s47, %s48
    %p57 = scmp.eq.s32.totalorder %s16, 0
    %p58 = por %p56, %p57
    %p59 = scmp.ne.s32.totalorder %s47, %s48
    %p60 = scmp.eq.s32.totalorder %s17, 1
    %p61 = por %p59, %p60
    %p63 = scmp.ne.s32.totalorder %s48, %s62
    %p64 = scmp.eq.s32.totalorder %s17, 0
    %p65 = por %p63, %p64
    %s67 = sadd.s32 %s66, 1
    %p70 = scmp.eq.s32.totalorder %s11, 1
    %p71 = scmp.ne.s32.totalorder %s66, %s68
    %p72 = scmp.eq.s32.totalorder %s11, 0
    %p73 = por %p71, %p72
    %p74 = scmp.ne.s32.totalorder %s66, %s68
    %p75 = scmp.eq.s32.totalorder %s16, 1
    %p76 = por %p74, %p75
    %p77 = scmp.ne.s32.totalorder %s68, %s69
    %p78 = scmp.eq.s32.totalorder %s16, 0
    %p79 = por %p77, %p78
    %p80 = scmp.ne.s32.totalorder %s68, %s69
    %p81 = scmp.eq.s32.totalorder %s17, 1
    %p82 = por %p80, %p81
    %p84 = scmp.ne.s32.totalorder %s69, %s83
    %p85 = scmp.eq.s32.totalorder %s17, 0
    %p86 = por %p84, %p85
    %s88 = sadd.s32 %s87, 1
    %p91 = scmp.eq.s32.totalorder %s11, 1
    %p92 = scmp.ne.s32.totalorder %s87, %s89
    %p93 = scmp.eq.s32.totalorder %s11, 0
    %p94 = por %p92, %p93
    %p95 = scmp.ne.s32.totalorder %s87, %s89
    %p96 = scmp.eq.s32.totalorder %s16, 1
    %p97 = por %p95, %p96
    %p98 = scmp.ne.s32.totalorder %s89, %s90
    %p99 = scmp.eq.s32.totalorder %s16, 0
    %p100 = por %p98, %p99
    %p101 = scmp.ne.s32.totalorder %s89, %s90
    %p102 = scmp.eq.s32.totalorder %s17, 1
    %p103 = por %p101, %p102
    %p105 = scmp.ne.s32.totalorder %s90, %s104
    %p106 = scmp.eq.s32.totalorder %s17, 0
    %p107 = por %p105, %p106
    %s109 = sadd.s32 %s108, 1
    %p112 = scmp.eq.s32.totalorder %s11, 1
    %p113 = scmp.ne.s32.totalorder %s108, %s110
    %p114 = scmp.eq.s32.totalorder %s11, 0
    %p115 = por %p113, %p114
    %p116 = scmp.ne.s32.totalorder %s108, %s110
    %p117 = scmp.eq.s32.totalorder %s16, 1
    %p118 = por %p116, %p117
    %p119 = scmp.ne.s32.totalorder %s110, %s111
    %p120 = scmp.eq.s32.totalorder %s16, 0
    %p121 = por %p119, %p120
    %p122 = scmp.ne.s32.totalorder %s110, %s111
    %p123 = scmp.eq.s32.totalorder %s17, 1
    %p124 = por %p122, %p123
    %p126 = scmp.ne.s32.totalorder %s111, %s125
    %p127 = scmp.eq.s32.totalorder %s17, 0
    %p128 = por %p126, %p127
    %s129 = ssub.s32 %s11, %s18
    %p130 = scmp.eq.s32.totalorder %s129, 0
    %s132 = sadd.s32 %s131, 1
    %s133 = scalar_select %p130, %s131, %s132
    %p136 = pneg %p130
    %p137 = scmp.eq.s32.totalorder %s11, 1
    %p138 = por %p136, %p137
    %p139 = scmp.ne.s32.totalorder %s131, %s134
    %p140 = scmp.eq.s32.totalorder %s11, 0
    %p141 = por %p139, %p140
    %p142 = scmp.ne.s32.totalorder %s131, %s134
    %p143 = scmp.eq.s32.totalorder %s16, 1
    %p144 = por %p142, %p143
    %p145 = scmp.ne.s32.totalorder %s134, %s135
    %p146 = scmp.eq.s32.totalorder %s16, 0
    %p147 = por %p145, %p146
    %p148 = scmp.ne.s32.totalorder %s134, %s135
    %p149 = scmp.eq.s32.totalorder %s17, 1
    %p150 = por %p148, %p149
    %p152 = scmp.ne.s32.totalorder %s135, %s151
    %p153 = scmp.eq.s32.totalorder %s17, 0
    %p154 = por %p152, %p153
    %p155 = scmp.le.s32.totalorder 1, %s11
    %p156 = scmp.lt.s32.totalorder %s11, 3
    %p157 = pnand %p155, %p156
    %p158 = pneg %p157
    // Predicated region
    $region9: #{model_tanh_pallas.1} parent=5 // pred_check
      _
    $region10: #{model_tanh_pallas.1} parent=5 // pred_check_branch
      %160 = sbr.rel (%p157) target = $region12
    $region11: #{model_tanh_pallas.1} parent=5 // pred_region
      %s161 = ssub.s32 %s11, 1
      // Predicated region
      $region13: #{model_tanh_pallas.1} parent=11 // pred_check
        %p162 = pneg %p58
      $region14: #{model_tanh_pallas.1} parent=11 // pred_check_branch
        %164 = sbr.rel (%p162) target = $region16
      $region15: #{model_tanh_pallas.1} parent=11 // pred_region
        _
      $region16: #{model_tanh_pallas.1} parent=11 // pred_fallthru
        _
      // Predicated region
      $region17: #{model_tanh_pallas.1} parent=11 // pred_check
        %p165 = pneg %p79
      $region18: #{model_tanh_pallas.1} parent=11 // pred_check_branch
        %167 = sbr.rel (%p165) target = $region20
      $region19: #{model_tanh_pallas.1} parent=11 // pred_region
        _
      $region20: #{model_tanh_pallas.1} parent=11 // pred_fallthru
        _
      // Predicated region
      $region21: #{model_tanh_pallas.1} parent=11 // pred_check
        %p168 = pneg %p100
      $region22: #{model_tanh_pallas.1} parent=11 // pred_check_branch
        %170 = sbr.rel (%p168) target = $region24
      $region23: #{model_tanh_pallas.1} parent=11 // pred_region
        _
      $region24: #{model_tanh_pallas.1} parent=11 // pred_fallthru
        _
      // Predicated region
      $region25: #{model_tanh_pallas.1} parent=11 // pred_check
        %p171 = pneg %p121
      $region26: #{model_tanh_pallas.1} parent=11 // pred_check_branch
        %173 = sbr.rel (%p171) target = $region28
      $region27: #{model_tanh_pallas.1} parent=11 // pred_region
        _
      $region28: #{model_tanh_pallas.1} parent=11 // pred_fallthru
        _
    $region12: #{model_tanh_pallas.1} parent=5 // pred_fallthru
      _
    %p174 = scmp.lt.s32.totalorder %s11, 2
    // Predicated region
    $region29: #{model_tanh_pallas.1} parent=5 // pred_check
      %p175 = pneg %p174
    $region30: #{model_tanh_pallas.1} parent=5 // pred_check_branch
      %177 = sbr.rel (%p175) target = $region32
    $region31: #{model_tanh_pallas.1} parent=5 // pred_region
      // Predicated region
      $region33: #{model_tanh_pallas.1} parent=31 // pred_check
        %p178 = pneg %p31
      $region34: #{model_tanh_pallas.1} parent=31 // pred_check_branch
        %180 = sbr.rel (%p178) target = $region36
      $region35: #{model_tanh_pallas.1} parent=31 // pred_region
        %p181 = scmp.lt.s32.totalorder %s11, 1
        %s182 = scalar_select %p181, %s11, 1
        %s183 = smul.addr %s182, 4
        %s184 = scalar_lea.vmem %s0, %s183
      $region36: #{model_tanh_pallas.1} parent=31 // pred_fallthru
        _
    $region32: #{model_tanh_pallas.1} parent=5 // pred_fallthru
      _
    %p185 = scmp.le.s32.totalorder 1, %s11
    %p186 = scmp.lt.s32.totalorder %s11, 3
    %p187 = pnand %p185, %p186
    %p188 = pneg %p187
    // Predicated region
    $region37: #{model_tanh_pallas.1} parent=5 // pred_check
      _
    $region38: #{model_tanh_pallas.1} parent=5 // pred_check_branch
      %190 = sbr.rel (%p187) target = $region40
    $region39: #{model_tanh_pallas.1} parent=5 // pred_region
      %s191 = ssub.s32 %s11, 1
      %p192 = scmp.lt.s32.totalorder %s16, 1
      %s193 = scalar_select %p192, %s16, 1
      %s194 = smul.addr %s193, 4
      %s195 = scalar_lea.vmem %s0, %s194
      %p196 = pneg %p37
      %p197 = pneg %p34
      %p198 = pneg %p58
      %p199 = pneg %p55
      %p200 = pneg %p79
      %p201 = pneg %p76
      %p202 = pneg %p100
      %p203 = pneg %p97
      %p204 = pneg %p121
      %p205 = pneg %p118
      %p206 = pneg %p147
      %p207 = pneg %p144
      %p208 = scmp.lt.s32.totalorder %s16, 1
      %s209 = scalar_select %p208, %s16, 1
      %s210 = smul.addr %s209, 2
      %s211 = smul.addr %s210, 2
      %s212 = scalar_lea.vmem %s5, %s211
      %p213 = scmp.lt.s32.totalorder %s16, 1
      %s214 = scalar_select %p213, %s16, 1
      %s215 = smul.addr %s214, 4
      %s216 = scalar_lea.vmem %s0, %s215
      %p217 = scmp.lt.s32.totalorder %s16, 1
      %s218 = scalar_select %p217, %s16, 1
      %s219 = smul.addr %s218, 2
      %s220 = smul.addr %s219, 2
      %s221 = scalar_lea.vmem %s5, %s220
      %v222 = vlaneseq
      %v223 = vand.u32 %v222, 127
      %v224 = vadd.s32 %v223, 128
      %vm225 = vcmp.lt.s32.totalorder %v223, 0
      %v226 = vsub.s32 0, %v223
      %v227 = vsel %vm225, %v226, %v223
      %v228 = vshrl.u32 %v227, 4
      %v229 = vand.u32 %v227, 15
      %v230 = vsub.s32 0, %v229
      %v231 = vsel %vm225, %v230, %v229
      %vm232 = vcmp.lt.s32.totalorder %v224, 0
      %v233 = vsub.s32 0, %v224
      %v234 = vsel %vm232, %v233, %v224
      %v235 = vshrl.u32 %v234, 4
      %v236 = vand.u32 %v234, 15
      %v237 = vsub.s32 0, %v236
      %v238 = vsel %vm232, %v237, %v236
      %vm239 = vcmp.ne.s32.totalorder %v231, 0
      %vm240 = vcmp.ne.s32.totalorder %v238, 0
      %vm241 = vcmp.lt.s32.totalorder %v231, 0
      %vm242 = vcmp.lt.s32.totalorder %v238, 0
      %vm243 = vmand %vm241, %vm239
      %vm244 = vmand %vm242, %vm240
      %v245 = vadd.s32 %v231, 16
      %v246 = vadd.s32 %v238, 16
      %v247 = vsel %vm243, %v245, %v231
      %v248 = vsel %vm244, %v246, %v238
      %vm249 = vcmp.gt.s32.totalorder %v247, 0
      %vm250 = vcmp.gt.s32.totalorder %v248, 0
      %vm251 = vcmp.lt.s32.totalorder %v247, 15
      %vm252 = vcmp.lt.s32.totalorder %v248, 15
      %v253 = vld [vmem:[%s216] sm:$0x7]
      %v255 = vlaneseq
      %v256 = vshrl.u32 %v255, 7
      %v257 = vsub.s32 0, %v256
      %v258 = vrot.slane %v253, %v257
      %v259 = vlaneseq
      %v260 = vshrl.u32 %v259, 7
      %v261 = vsub.s32 1, %v260
      %v262 = vrot.slane %v253, %v261
      %v263 = vlaneseq
      %v264 = vshrl.u32 %v263, 7
      %v265 = vsub.s32 2, %v264
      %v266 = vrot.slane %v253, %v265
      %267 = vrot.lane.b32.xlu0 %v258, 17
      %v268 = vpop.permute.xlu0 %267
      %269 = vrot.lane.b32.xlu0 %v262, 17
      %v270 = vpop.permute.xlu0 %269
      %271 = vrot.lane.b32.xlu0 %v266, 17
      %v272 = vpop.permute.xlu0 %271
      %vm273 = vcmask 138240
      %v274 = vsel %vm273, %v268, %v270
      %v275 = vsel %vm273, %v270, %v272
      %v278 = vsel %vm249, %v274, 0.0
      %v279 = vsel %vm250, %v275, 0.0
      %280 = vrot.lane.b32.xlu0 %v258, 15
      %v281 = vpop.permute.xlu0 %280
      %282 = vrot.lane.b32.xlu0 %v262, 15
      %v283 = vpop.permute.xlu0 %282
      %284 = vrot.lane.b32.xlu0 %v266, 15
      %v285 = vpop.permute.xlu0 %284
      %vm286 = vcmask 121856
      %v287 = vsel %vm286, %v281, %v283
      %v288 = vsel %vm286, %v283, %v285
      %v291 = vsel %vm251, %v287, 0.0
      %v292 = vsel %vm252, %v288, 0.0
      %293 = vrot.lane.b32.xlu0 %v258, 1
      %v294 = vpop.permute.xlu0 %293
      %295 = vrot.lane.b32.xlu0 %v262, 1
      %v296 = vpop.permute.xlu0 %295
      %297 = vrot.lane.b32.xlu0 %v266, 1
      %v298 = vpop.permute.xlu0 %297
      %vm299 = vcmask 7168
      %v300 = vsel %vm299, %v294, %v296
      %v301 = vsel %vm299, %v296, %v298
      %v304 = vsel %vm249, %v300, 0.0
      %v305 = vsel %vm250, %v301, 0.0
      %v306 = vld [vmem:[%s216 + $0x1] sm:$0x3]
      %v307 = vld [vmem:[%s216 + $0x1] sm:$0x7]
      %v309 = vlaneseq
      %v310 = vshrl.u32 %v309, 7
      %v311 = vsub.s32 0, %v310
      %v312 = vrot.slane %v307, %v311
      %v313 = vlaneseq
      %v314 = vshrl.u32 %v313, 7
      %v315 = vsub.s32 1, %v314
      %v316 = vrot.slane %v307, %v315
      %v317 = vlaneseq
      %v318 = vshrl.u32 %v317, 7
      %v319 = vsub.s32 2, %v318
      %v320 = vrot.slane %v307, %v319
      %321 = vrot.lane.b32.xlu0 %v312, 127
      %v322 = vpop.permute.xlu0 %321
      %323 = vrot.lane.b32.xlu0 %v316, 127
      %v324 = vpop.permute.xlu0 %323
      %325 = vrot.lane.b32.xlu0 %v320, 127
      %v326 = vpop.permute.xlu0 %325
      %vm327 = vcmask 1039360
      %v328 = vsel %vm327, %v322, %v324
      %v329 = vsel %vm327, %v324, %v326
      %v332 = vsel %vm251, %v328, 0.0
      %v333 = vsel %vm252, %v329, 0.0
      %334 = vrot.lane.b32.xlu0 %v312, 113
      %v335 = vpop.permute.xlu0 %334
      %336 = vrot.lane.b32.xlu0 %v316, 113
      %v337 = vpop.permute.xlu0 %336
      %338 = vrot.lane.b32.xlu0 %v320, 113
      %v339 = vpop.permute.xlu0 %338
      %vm340 = vcmask 924672
      %v341 = vsel %vm340, %v335, %v337
      %v342 = vsel %vm340, %v337, %v339
      %v345 = vsel %vm249, %v341, 0.0
      %v346 = vsel %vm250, %v342, 0.0
      %347 = vrot.lane.b32.xlu0 %v312, 111
      %v348 = vpop.permute.xlu0 %347
      %349 = vrot.lane.b32.xlu0 %v316, 111
      %v350 = vpop.permute.xlu0 %349
      %351 = vrot.lane.b32.xlu0 %v320, 111
      %v352 = vpop.permute.xlu0 %351
      %vm353 = vcmask 908288
      %v354 = vsel %vm353, %v348, %v350
      %v355 = vsel %vm353, %v350, %v352
      %v358 = vsel %vm251, %v354, 0.0
      %v359 = vsel %vm252, %v355, 0.0
      %360 = vrot.lane.b32.xlu0 %v258, 16
      %v361 = vpop.permute.xlu0 %360
      %362 = vrot.lane.b32.xlu0 %v262, 16
      %v363 = vpop.permute.xlu0 %362
      %364 = vrot.lane.b32.xlu0 %v266, 16
      %v365 = vpop.permute.xlu0 %364
      %vm366 = vcmask 130048
      %v367 = vsel %vm366, %v361, %v363
      %v368 = vsel %vm366, %v363, %v365
      %v373 = vrot.slane %v291, 6
      %v374 = vrot.slane %v292, 6
      %v379 = vrot.slane %v304, 5
      %v380 = vrot.slane %v305, 5
      %v384 = vlaneseq
      %v385 = vshrl.u32 %v384, 7
      %v386 = vsub.s32 0, %v385
      %v387 = vrot.slane %v306, %v386
      %v388 = vlaneseq
      %v389 = vshrl.u32 %v388, 7
      %v390 = vsub.s32 1, %v389
      %v391 = vrot.slane %v306, %v390
      %v396 = vrot.slane %v332, 3
      %v397 = vrot.slane %v333, 3
      %v402 = vrot.slane %v345, 2
      %v403 = vrot.slane %v346, 2
      %406 = vrot.lane.b32.xlu0 %v312, 112
      %v407 = vpop.permute.xlu0 %406
      %408 = vrot.lane.b32.xlu0 %v316, 112
      %v409 = vpop.permute.xlu0 %408
      %410 = vrot.lane.b32.xlu0 %v320, 112
      %v411 = vpop.permute.xlu0 %410
      %vm412 = vcmask 916480
      %v413 = vsel %vm412, %v407, %v409
      %v414 = vsel %vm412, %v409, %v411
      %vm417 = vcmask 1040384
      %v418 = vsel %vm417, %v278, %v367
      %v419 = vsel %vm417, %v279, %v368
      %vm420 = vcmask 1041408
      %v421 = vsel %vm420, %v418, %v373
      %v422 = vsel %vm420, %v419, %v374
      %vm423 = vcmask 1042432
      %v424 = vsel %vm423, %v421, %v379
      %v425 = vsel %vm423, %v422, %v380
      %vm426 = vcmask 1043456
      %v427 = vsel %vm426, %v424, %v387
      %v428 = vsel %vm426, %v425, %v391
      %vm429 = vcmask 1044480
      %v430 = vsel %vm429, %v427, %v396
      %v431 = vsel %vm429, %v428, %v397
      %vm432 = vcmask 1045504
      %v433 = vsel %vm432, %v430, %v402
      %v434 = vsel %vm432, %v431, %v403
      %vm435 = vcmask 1046528
      %v436 = vsel %vm435, %v433, %v413
      %v437 = vsel %vm435, %v434, %v414
      %v438 = vld [vmem:[%s1] sm:$0xff]
      %v439 = vld [vmem:[%s1 + $0x8] sm:$0xff]
      %v440 = vld [vmem:[%s1 + $0x10] sm:$0xff]
      %v441 = vld [vmem:[%s1 + $0x18] sm:$0xff]
      %v442 = vld [vmem:[%s1 + $0x20] sm:$0xff]
      %v443 = vld [vmem:[%s1 + $0x28] sm:$0xff]
      %v444 = vld [vmem:[%s1 + $0x30] sm:$0xff]
      %v445 = vld [vmem:[%s1 + $0x38] sm:$0xff]
      %v446 = vld [vmem:[%s2] sm:$0xff]
      %v447 = vld [vmem:[%s2 + $0x8] sm:$0xff]
      %v448 = vld [vmem:[%s2 + $0x10] sm:$0xff]
      %v449 = vld [vmem:[%s2 + $0x18] sm:$0xff]
      %v450 = vld [vmem:[%s2 + $0x20] sm:$0xff]
      %v451 = vld [vmem:[%s2 + $0x28] sm:$0xff]
      %v452 = vld [vmem:[%s2 + $0x30] sm:$0xff]
      %v453 = vld [vmem:[%s2 + $0x38] sm:$0xff]
      %455 = vset.pattern.permute.xlu0 0
      %456 = vperm.xlu0 %455, %v446
      %v457 = vpop.permute.xlu0 %456
      %460 = vset.pattern.permute.xlu0 0
      %461 = vperm.xlu0 %460, %v447
      %v462 = vpop.permute.xlu0 %461
      %465 = vset.pattern.permute.xlu0 0
      %466 = vperm.xlu0 %465, %v448
      %v467 = vpop.permute.xlu0 %466
      %470 = vset.pattern.permute.xlu0 0
      %471 = vperm.xlu0 %470, %v449
      %v472 = vpop.permute.xlu0 %471
      %475 = vset.pattern.permute.xlu0 0
      %476 = vperm.xlu0 %475, %v450
      %v477 = vpop.permute.xlu0 %476
      %480 = vset.pattern.permute.xlu0 0
      %481 = vperm.xlu0 %480, %v451
      %v482 = vpop.permute.xlu0 %481
      %485 = vset.pattern.permute.xlu0 0
      %486 = vperm.xlu0 %485, %v452
      %v487 = vpop.permute.xlu0 %486
      %490 = vset.pattern.permute.xlu0 0
      %491 = vperm.xlu0 %490, %v453
      %v492 = vpop.permute.xlu0 %491
      %vm494 = vcmask 72704
      %v496 = vsel %vm494, %v438, 0
      %v499 = vsel %vm494, %v439, 0
      %v502 = vsel %vm494, %v440, 0
      %v505 = vsel %vm494, %v441, 0
      %v508 = vsel %vm494, %v442, 0
      %v511 = vsel %vm494, %v443, 0
      %v514 = vsel %vm494, %v444, 0
      %v517 = vsel %vm494, %v445, 0
      %v520 = vsel %vm417, %v358, 0
      %v523 = vsel %vm417, %v359, 0
      %525 = vmatprep.subr.mxu0 %v437
      %526 = vmatpush1.msra.mxu0 %v436
      %527 = vmatprep.subr.mxu0 %v523
      %528 = vmatpush1.msra.mxu0 %v520
      %529 = vmatprep.subr.mxu0 0.0
      %530 = vmatpush1.msra.mxu0 0.0
      %531 = vmatprep.subr.mxu0 0.0
      %532 = vmatpush1.msra.mxu0 0.0
      %533 = vmatprep.subr.mxu0 0.0
      %534 = vmatpush1.msra.mxu0 0.0
      %535 = vmatprep.subr.mxu0 0.0
      %536 = vmatpush1.msra.mxu0 0.0
      %537 = vmatprep.subr.mxu0 0.0
      %538 = vmatpush1.msra.mxu0 0.0
      %539 = vmatprep.subr.mxu0 0.0
      %540 = vmatpush1.msra.mxu0 0.0
      %541 = vmatprep.subr.mxu0 0.0
      %542 = vmatpush1.msra.mxu0 0.0
      %543 = vmatprep.subr.mxu0 0.0
      %544 = vmatpush1.msra.mxu0 0.0
      %545 = vmatprep.subr.mxu0 0.0
      %546 = vmatpush1.msra.mxu0 0.0
      %547 = vmatprep.subr.mxu0 0.0
      %548 = vmatpush1.msra.mxu0 0.0
      %549 = vmatprep.subr.mxu0 0.0
      %550 = vmatpush1.msra.mxu0 0.0
      %551 = vmatprep.subr.mxu0 0.0
      %552 = vmatpush1.msra.mxu0 0.0
      %553 = vmatprep.subr.mxu0 0.0
      %554 = vmatpush1.msra.mxu0 0.0
      %555 = vmatprep.subr.mxu0 0.0
      %556 = vmatpush1.msra.mxu0 0.0
      %557 = vmatprep.subr.mxu0 0.0
      %558 = vmatpush1.msra.mxu0 0.0
      %559 = vmatprep.subr.mxu0 0.0
      %560 = vmatpush1.msra.mxu0 0.0
      %561 = vmatprep.subr.mxu0 0.0
      %562 = vmatpush1.msra.mxu0 0.0
      %563 = vmatprep.subr.mxu0 0.0
      %564 = vmatpush1.msra.mxu0 0.0
      %565 = vmatprep.subr.mxu0 0.0
      %566 = vmatpush1.msra.mxu0 0.0
      %567 = vmatprep.subr.mxu0 0.0
      %568 = vmatpush1.msra.mxu0 0.0
      %569 = vmatprep.subr.mxu0 0.0
      %570 = vmatpush1.msra.mxu0 0.0
      %571 = vmatprep.subr.mxu0 0.0
      %572 = vmatpush1.msra.mxu0 0.0
      %573 = vmatprep.subr.mxu0 0.0
      %574 = vmatpush1.msra.mxu0 0.0
      %575 = vmatprep.subr.mxu0 0.0
      %576 = vmatpush1.msra.mxu0 0.0
      %577 = vmatprep.subr.mxu0 0.0
      %578 = vmatpush1.msra.mxu0 0.0
      %579 = vmatprep.subr.mxu0 0.0
      %580 = vmatpush1.msra.mxu0 0.0
      %581 = vmatprep.subr.mxu0 0.0
      %582 = vmatpush1.msra.mxu0 0.0
      %583 = vmatprep.subr.mxu0 0.0
      %584 = vmatpush1.msra.mxu0 0.0
      %585 = vmatprep.subr.mxu0 0.0
      %586 = vmatpush1.msra.mxu0 0.0
      %587 = vmatprep.subr.mxu0 0.0
      %588 = vmatpush1.msra.mxu0 0.0
      %589 = vmatprep.mubr.f32.mxu0 0.0
      %590 = vmatmul.mubr.f32.gmra.mrb[0].mxu0 %v496
      %v591 = vpop.f32.mrb[0].mxu0
      %v592 = vadd.f32 %v457, %v591
      %v593 = vpop.f32.mrb[0].mxu0
      %v594 = vadd.f32 %v457, %v593
      %595 = vmatprep.mubr.f32.mxu0 0.0
      %596 = vmatmul.mubr.f32.gmra.mrb[0].mxu0 %v499
      %v597 = vpop.f32.mrb[0].mxu0
      %v598 = vadd.f32 %v462, %v597
      %v599 = vpop.f32.mrb[0].mxu0
      %v600 = vadd.f32 %v462, %v599
      %601 = vmatprep.mubr.f32.mxu0 0.0
      %602 = vmatmul.mubr.f32.gmra.mrb[0].mxu0 %v502
      %v603 = vpop.f32.mrb[0].mxu0
      %v604 = vadd.f32 %v467, %v603
      %v605 = vpop.f32.mrb[0].mxu0
      %v606 = vadd.f32 %v467, %v605
      %607 = vmatprep.mubr.f32.mxu0 0.0
      %608 = vmatmul.mubr.f32.gmra.mrb[0].mxu0 %v505
      %v609 = vpop.f32.mrb[0].mxu0
      %v610 = vadd.f32 %v472, %v609
      %v611 = vpop.f32.mrb[0].mxu0
      %v612 = vadd.f32 %v472, %v611
      %613 = vmatprep.mubr.f32.mxu0 0.0
      %614 = vmatmul.mubr.f32.gmra.mrb[0].mxu0 %v508
      %v615 = vpop.f32.mrb[0].mxu0
      %v616 = vadd.f32 %v477, %v615
      %v617 = vpop.f32.mrb[0].mxu0
      %v618 = vadd.f32 %v477, %v617
      %619 = vmatprep.mubr.f32.mxu0 0.0
      %620 = vmatmul.mubr.f32.gmra.mrb[0].mxu0 %v511
      %v621 = vpop.f32.mrb[0].mxu0
      %v622 = vadd.f32 %v482, %v621
      %v623 = vpop.f32.mrb[0].mxu0
      %v624 = vadd.f32 %v482, %v623
      %625 = vmatprep.mubr.f32.mxu0 0.0
      %626 = vmatmul.mubr.f32.gmra.mrb[0].mxu0 %v514
      %v627 = vpop.f32.mrb[0].mxu0
      %v628 = vadd.f32 %v487, %v627
      %v629 = vpop.f32.mrb[0].mxu0
      %v630 = vadd.f32 %v487, %v629
      %631 = vmatprep.mubr.f32.mxu0 0.0
      %632 = vmatmul.mubr.f32.gmra.mrb[0].mxu0 %v517
      %v633 = vpop.f32.mrb[0].mxu0
      %v634 = vadd.f32 %v492, %v633
      %v635 = vpop.f32.mrb[0].mxu0
      %v636 = vadd.f32 %v492, %v635
      %637 = vdwg.mxu0
      %638 = vst [vmem:[#allocation2] sm:$0xff] 0.0
      %639 = vst [vmem:[#allocation2 + $0x20] sm:$0xff] 0.0
      %640 = vst [vmem:[#allocation2 + $0x40] sm:$0xff] 0.0
      %641 = vst [vmem:[#allocation2 + $0x60] sm:$0xff] 0.0
      %642 = vst [vmem:[#allocation2 + $0x80] sm:$0xff] 0.0
      %643 = vst [vmem:[#allocation2 + $0xa0] sm:$0xff] 0.0
      %644 = vst [vmem:[#allocation2 + $0xc0] sm:$0xff] 0.0
      %645 = vst [vmem:[#allocation2 + $0xe0] sm:$0xff] 0.0
      %646 = vst [vmem:[#allocation2 + $0x18] sm:$0xff] 0.0
      %647 = vst [vmem:[#allocation2 + $0x38] sm:$0xff] 0.0
      %648 = vst [vmem:[#allocation2 + $0x58] sm:$0xff] 0.0
      %649 = vst [vmem:[#allocation2 + $0x78] sm:$0xff] 0.0
      %650 = vst [vmem:[#allocation2 + $0x98] sm:$0xff] 0.0
      %651 = vst [vmem:[#allocation2 + $0xb8] sm:$0xff] 0.0
      %652 = vst [vmem:[#allocation2 + $0xd8] sm:$0xff] 0.0
      %653 = vst [vmem:[#allocation2 + $0xf8] sm:$0xff] 0.0
      %654 = vst [vmem:[#allocation2 + $0x8] sm:$0xff] %v592
      %655 = vst [vmem:[#allocation2 + $0x10] sm:$0xff] %v594
      %656 = vst [vmem:[#allocation2 + $0x28] sm:$0xff] %v598
      %657 = vst [vmem:[#allocation2 + $0x30] sm:$0xff] %v600
      %658 = vst [vmem:[#allocation2 + $0x48] sm:$0xff] %v604
      %659 = vst [vmem:[#allocation2 + $0x50] sm:$0xff] %v606
      %660 = vst [vmem:[#allocation2 + $0x68] sm:$0xff] %v610
      %661 = vst [vmem:[#allocation2 + $0x70] sm:$0xff] %v612
      %662 = vst [vmem:[#allocation2 + $0x88] sm:$0xff] %v616
      %663 = vst [vmem:[#allocation2 + $0x90] sm:$0xff] %v618
      %664 = vst [vmem:[#allocation2 + $0xa8] sm:$0xff] %v622
      %665 = vst [vmem:[#allocation2 + $0xb0] sm:$0xff] %v624
      %666 = vst [vmem:[#allocation2 + $0xc8] sm:$0xff] %v628
      %667 = vst [vmem:[#allocation2 + $0xd0] sm:$0xff] %v630
      %668 = vst [vmem:[#allocation2 + $0xe8] sm:$0xff] %v634
      %669 = vst [vmem:[#allocation2 + $0xf0] sm:$0xff] %v636
      %v670 = vld [vmem:[#allocation2] sm:$0xff]
      %v671 = vld [vmem:[#allocation2 + $0x8] sm:$0xff]
      %v672 = vld [vmem:[#allocation2 + $0x10] sm:$0xff]
      %v673 = vld [vmem:[#allocation2 + $0x20] sm:$0xff]
      %v674 = vld [vmem:[#allocation2 + $0x28] sm:$0xff]
      %v675 = vld [vmem:[#allocation2 + $0x30] sm:$0xff]
      %v676 = vld [vmem:[#allocation2 + $0x40] sm:$0xff]
      %v677 = vld [vmem:[#allocation2 + $0x48] sm:$0xff]
      %v678 = vld [vmem:[#allocation2 + $0x50] sm:$0xff]
      %v679 = vld [vmem:[#allocation2 + $0x60] sm:$0xff]
      %v680 = vld [vmem:[#allocation2 + $0x68] sm:$0xff]
      %v681 = vld [vmem:[#allocation2 + $0x70] sm:$0xff]
      %v682 = vld [vmem:[#allocation2 + $0x80] sm:$0xff]
      %v683 = vld [vmem:[#allocation2 + $0x88] sm:$0xff]
      %v684 = vld [vmem:[#allocation2 + $0x90] sm:$0xff]
      %v685 = vld [vmem:[#allocation2 + $0xa0] sm:$0xff]
      %v686 = vld [vmem:[#allocation2 + $0xa8] sm:$0xff]
      %v687 = vld [vmem:[#allocation2 + $0xb0] sm:$0xff]
      %v688 = vld [vmem:[#allocation2 + $0xc0] sm:$0xff]
      %v689 = vld [vmem:[#allocation2 + $0xc8] sm:$0xff]
      %v690 = vld [vmem:[#allocation2 + $0xd0] sm:$0xff]
      %v691 = vld [vmem:[#allocation2 + $0xe0] sm:$0xff]
      %v692 = vld [vmem:[#allocation2 + $0xe8] sm:$0xff]
      %v693 = vld [vmem:[#allocation2 + $0xf0] sm:$0xff]
      %v694 = vld [vmem:[%s3] sm:$0x3]
      %s695 = scalar_lea.vmem %s3, 6
      %v696 = vld [vmem:[%s695] sm:$0x3]
      %721 = vrot.lane.b32.xlu0 %v670, 1
      %v722 = vpop.permute.xlu0 %721
      %723 = vrot.lane.b32.xlu0 %v671, 1
      %v724 = vpop.permute.xlu0 %723
      %725 = vrot.lane.b32.xlu0 %v672, 1
      %v726 = vpop.permute.xlu0 %725
      %727 = vrot.lane.b32.xlu0 %v673, 1
      %v728 = vpop.permute.xlu0 %727
      %729 = vrot.lane.b32.xlu0 %v674, 1
      %v730 = vpop.permute.xlu0 %729
      %731 = vrot.lane.b32.xlu0 %v675, 1
      %v732 = vpop.permute.xlu0 %731
      %733 = vrot.lane.b32.xlu0 %v676, 1
      %v734 = vpop.permute.xlu0 %733
      %735 = vrot.lane.b32.xlu0 %v677, 1
      %v736 = vpop.permute.xlu0 %735
      %737 = vrot.lane.b32.xlu0 %v678, 1
      %v738 = vpop.permute.xlu0 %737
      %739 = vrot.lane.b32.xlu0 %v679, 1
      %v740 = vpop.permute.xlu0 %739
      %741 = vrot.lane.b32.xlu0 %v680, 1
      %v742 = vpop.permute.xlu0 %741
      %743 = vrot.lane.b32.xlu0 %v681, 1
      %v744 = vpop.permute.xlu0 %743
      %745 = vrot.lane.b32.xlu0 %v682, 1
      %v746 = vpop.permute.xlu0 %745
      %747 = vrot.lane.b32.xlu0 %v683, 1
      %v748 = vpop.permute.xlu0 %747
      %749 = vrot.lane.b32.xlu0 %v684, 1
      %v750 = vpop.permute.xlu0 %749
      %751 = vrot.lane.b32.xlu0 %v685, 1
      %v752 = vpop.permute.xlu0 %751
      %753 = vrot.lane.b32.xlu0 %v686, 1
      %v754 = vpop.permute.xlu0 %753
      %755 = vrot.lane.b32.xlu0 %v687, 1
      %v756 = vpop.permute.xlu0 %755
      %757 = vrot.lane.b32.xlu0 %v688, 1
      %v758 = vpop.permute.xlu0 %757
      %759 = vrot.lane.b32.xlu0 %v689, 1
      %v760 = vpop.permute.xlu0 %759
      %761 = vrot.lane.b32.xlu0 %v690, 1
      %v762 = vpop.permute.xlu0 %761
      %763 = vrot.lane.b32.xlu0 %v691, 1
      %v764 = vpop.permute.xlu0 %763
      %765 = vrot.lane.b32.xlu0 %v692, 1
      %v766 = vpop.permute.xlu0 %765
      %767 = vrot.lane.b32.xlu0 %v693, 1
      %v768 = vpop.permute.xlu0 %767
      %v769 = vsel %vm299, %v722, %v724
      %v770 = vsel %vm299, %v724, %v726
      %v771 = vsel %vm299, %v728, %v730
      %v772 = vsel %vm299, %v730, %v732
      %v773 = vsel %vm299, %v734, %v736
      %v774 = vsel %vm299, %v736, %v738
      %v775 = vsel %vm299, %v740, %v742
      %v776 = vsel %vm299, %v742, %v744
      %v777 = vsel %vm299, %v746, %v748
      %v778 = vsel %vm299, %v748, %v750
      %v779 = vsel %vm299, %v752, %v754
      %v780 = vsel %vm299, %v754, %v756
      %v781 = vsel %vm299, %v758, %v760
      %v782 = vsel %vm299, %v760, %v762
      %v783 = vsel %vm299, %v764, %v766
      %v784 = vsel %vm299, %v766, %v768
      %vm801 = vcmask 523264
      %v803 = vsel %vm801, %v696, 0
      %805 = vmatprep.subr.mxu0 %v770
      %806 = vmatpush1.msra.mxu0 %v769
      %807 = vmatprep.subr.mxu0 %v772
      %808 = vmatpush1.msra.mxu0 %v771
      %809 = vmatprep.subr.mxu0 %v774
      %810 = vmatpush1.msra.mxu0 %v773
      %811 = vmatprep.subr.mxu0 %v776
      %812 = vmatpush1.msra.mxu0 %v775
      %813 = vmatprep.subr.mxu0 %v778
      %814 = vmatpush1.msra.mxu0 %v777
      %815 = vmatprep.subr.mxu0 %v780
      %816 = vmatpush1.msra.mxu0 %v779
      %817 = vmatprep.subr.mxu0 %v782
      %818 = vmatpush1.msra.mxu0 %v781
      %819 = vmatprep.subr.mxu0 %v784
      %820 = vmatpush1.msra.mxu0 %v783
      %821 = vmatprep.subr.mxu0 0.0
      %822 = vmatpush1.msra.mxu0 0.0
      %823 = vmatprep.subr.mxu0 0.0
      %824 = vmatpush1.msra.mxu0 0.0
      %825 = vmatprep.subr.mxu0 0.0
      %826 = vmatpush1.msra.mxu0 0.0
      %827 = vmatprep.subr.mxu0 0.0
      %828 = vmatpush1.msra.mxu0 0.0
      %829 = vmatprep.subr.mxu0 0.0
      %830 = vmatpush1.msra.mxu0 0.0
      %831 = vmatprep.subr.mxu0 0.0
      %832 = vmatpush1.msra.mxu0 0.0
      %833 = vmatprep.subr.mxu0 0.0
      %834 = vmatpush1.msra.mxu0 0.0
      %835 = vmatprep.subr.mxu0 0.0
      %836 = vmatpush1.msra.mxu0 0.0
      %837 = vmatprep.subr.mxu0 0.0
      %838 = vmatpush1.msra.mxu0 0.0
      %839 = vmatprep.subr.mxu0 0.0
      %840 = vmatpush1.msra.mxu0 0.0
      %841 = vmatprep.subr.mxu0 0.0
      %842 = vmatpush1.msra.mxu0 0.0
      %843 = vmatprep.subr.mxu0 0.0
      %844 = vmatpush1.msra.mxu0 0.0
      %845 = vmatprep.subr.mxu0 0.0
      %846 = vmatpush1.msra.mxu0 0.0
      %847 = vmatprep.subr.mxu0 0.0
      %848 = vmatpush1.msra.mxu0 0.0
      %849 = vmatprep.subr.mxu0 0.0
      %850 = vmatpush1.msra.mxu0 0.0
      %851 = vmatprep.subr.mxu0 0.0
      %852 = vmatpush1.msra.mxu0 0.0
      %853 = vmatprep.subr.mxu0 0.0
      %854 = vmatpush1.msra.mxu0 0.0
      %855 = vmatprep.subr.mxu0 0.0
      %856 = vmatpush1.msra.mxu0 0.0
      %857 = vmatprep.subr.mxu0 0.0
      %858 = vmatpush1.msra.mxu0 0.0
      %859 = vmatprep.subr.mxu0 0.0
      %860 = vmatpush1.msra.mxu0 0.0
      %861 = vmatprep.subr.mxu0 0.0
      %862 = vmatpush1.msra.mxu0 0.0
      %863 = vmatprep.subr.mxu0 0.0
      %864 = vmatpush1.msra.mxu0 0.0
      %865 = vmatprep.subr.mxu0 0.0
      %866 = vmatpush1.msra.mxu0 0.0
      %867 = vmatprep.subr.mxu0 0.0
      %868 = vmatpush1.msra.mxu0 0.0
      %869 = vmatprep.mubr.f32.mxu0 0.0
      %870 = vmatmul.mubr.f32.gmra.mrb[0].mxu0 %v803
      %v871 = vpop.f32.mrb[0].mxu0
      %v872 = vadd.f32 0.0, %v871
      %v873 = vpop.f32.mrb[0].mxu0
      %v874 = vadd.f32 0.0, %v873
      %875 = vdwg.mxu0
      %876 = vrot.lane.b32.xlu0 %v670, 17
      %v877 = vpop.permute.xlu0 %876
      %878 = vrot.lane.b32.xlu0 %v671, 17
      %v879 = vpop.permute.xlu0 %878
      %880 = vrot.lane.b32.xlu0 %v672, 17
      %v881 = vpop.permute.xlu0 %880
      %882 = vrot.lane.b32.xlu0 %v673, 17
      %v883 = vpop.permute.xlu0 %882
      %884 = vrot.lane.b32.xlu0 %v674, 17
      %v885 = vpop.permute.xlu0 %884
      %886 = vrot.lane.b32.xlu0 %v675, 17
      %v887 = vpop.permute.xlu0 %886
      %888 = vrot.lane.b32.xlu0 %v676, 17
      %v889 = vpop.permute.xlu0 %888
      %890 = vrot.lane.b32.xlu0 %v677, 17
      %v891 = vpop.permute.xlu0 %890
      %892 = vrot.lane.b32.xlu0 %v678, 17
      %v893 = vpop.permute.xlu0 %892
      %894 = vrot.lane.b32.xlu0 %v679, 17
      %v895 = vpop.permute.xlu0 %894
      %896 = vrot.lane.b32.xlu0 %v680, 17
      %v897 = vpop.permute.xlu0 %896
      %898 = vrot.lane.b32.xlu0 %v681, 17
      %v899 = vpop.permute.xlu0 %898
      %900 = vrot.lane.b32.xlu0 %v682, 17
      %v901 = vpop.permute.xlu0 %900
      %902 = vrot.lane.b32.xlu0 %v683, 17
      %v903 = vpop.permute.xlu0 %902
      %904 = vrot.lane.b32.xlu0 %v684, 17
      %v905 = vpop.permute.xlu0 %904
      %906 = vrot.lane.b32.xlu0 %v685, 17
      %v907 = vpop.permute.xlu0 %906
      %908 = vrot.lane.b32.xlu0 %v686, 17
      %v909 = vpop.permute.xlu0 %908
      %910 = vrot.lane.b32.xlu0 %v687, 17
      %v911 = vpop.permute.xlu0 %910
      %912 = vrot.lane.b32.xlu0 %v688, 17
      %v913 = vpop.permute.xlu0 %912
      %914 = vrot.lane.b32.xlu0 %v689, 17
      %v915 = vpop.permute.xlu0 %914
      %916 = vrot.lane.b32.xlu0 %v690, 17
      %v917 = vpop.permute.xlu0 %916
      %918 = vrot.lane.b32.xlu0 %v691, 17
      %v919 = vpop.permute.xlu0 %918
      %920 = vrot.lane.b32.xlu0 %v692, 17
      %v921 = vpop.permute.xlu0 %920
      %922 = vrot.lane.b32.xlu0 %v693, 17
      %v923 = vpop.permute.xlu0 %922
      %v924 = vsel %vm273, %v877, %v879
      %v925 = vsel %vm273, %v879, %v881
      %v926 = vsel %vm273, %v883, %v885
      %v927 = vsel %vm273, %v885, %v887
      %v928 = vsel %vm273, %v889, %v891
      %v929 = vsel %vm273, %v891, %v893
      %v930 = vsel %vm273, %v895, %v897
      %v931 = vsel %vm273, %v897, %v899
      %v932 = vsel %vm273, %v901, %v903
      %v933 = vsel %vm273, %v903, %v905
      %v934 = vsel %vm273, %v907, %v909
      %v935 = vsel %vm273, %v909, %v911
      %v936 = vsel %vm273, %v913, %v915
      %v937 = vsel %vm273, %v915, %v917
      %v938 = vsel %vm273, %v919, %v921
      %v939 = vsel %vm273, %v921, %v923
      %v957 = vsel %vm801, %v694, 0
      %959 = vmatprep.subr.mxu0 %v925
      %960 = vmatpush1.msra.mxu0 %v924
      %961 = vmatprep.subr.mxu0 %v927
      %962 = vmatpush1.msra.mxu0 %v926
      %963 = vmatprep.subr.mxu0 %v929
      %964 = vmatpush1.msra.mxu0 %v928
      %965 = vmatprep.subr.mxu0 %v931
      %966 = vmatpush1.msra.mxu0 %v930
      %967 = vmatprep.subr.mxu0 %v933
      %968 = vmatpush1.msra.mxu0 %v932
      %969 = vmatprep.subr.mxu0 %v935
      %970 = vmatpush1.msra.mxu0 %v934
      %971 = vmatprep.subr.mxu0 %v937
      %972 = vmatpush1.msra.mxu0 %v936
      %973 = vmatprep.subr.mxu0 %v939
      %974 = vmatpush1.msra.mxu0 %v938
      %975 = vmatprep.subr.mxu0 0.0
      %976 = vmatpush1.msra.mxu0 0.0
      %977 = vmatprep.subr.mxu0 0.0
      %978 = vmatpush1.msra.mxu0 0.0
      %979 = vmatprep.subr.mxu0 0.0
      %980 = vmatpush1.msra.mxu0 0.0
      %981 = vmatprep.subr.mxu0 0.0
      %982 = vmatpush1.msra.mxu0 0.0
      %983 = vmatprep.subr.mxu0 0.0
      %984 = vmatpush1.msra.mxu0 0.0
      %985 = vmatprep.subr.mxu0 0.0
      %986 = vmatpush1.msra.mxu0 0.0
      %987 = vmatprep.subr.mxu0 0.0
      %988 = vmatpush1.msra.mxu0 0.0
      %989 = vmatprep.subr.mxu0 0.0
      %990 = vmatpush1.msra.mxu0 0.0
      %991 = vmatprep.subr.mxu0 0.0
      %992 = vmatpush1.msra.mxu0 0.0
      %993 = vmatprep.subr.mxu0 0.0
      %994 = vmatpush1.msra.mxu0 0.0
      %995 = vmatprep.subr.mxu0 0.0
      %996 = vmatpush1.msra.mxu0 0.0
      %997 = vmatprep.subr.mxu0 0.0
      %998 = vmatpush1.msra.mxu0 0.0
      %999 = vmatprep.subr.mxu0 0.0
      %1000 = vmatpush1.msra.mxu0 0.0
      %1001 = vmatprep.subr.mxu0 0.0
      %1002 = vmatpush1.msra.mxu0 0.0
      %1003 = vmatprep.subr.mxu0 0.0
      %1004 = vmatpush1.msra.mxu0 0.0
      %1005 = vmatprep.subr.mxu0 0.0
      %1006 = vmatpush1.msra.mxu0 0.0
      %1007 = vmatprep.subr.mxu0 0.0
      %1008 = vmatpush1.msra.mxu0 0.0
      %1009 = vmatprep.subr.mxu0 0.0
      %1010 = vmatpush1.msra.mxu0 0.0
      %1011 = vmatprep.subr.mxu0 0.0
      %1012 = vmatpush1.msra.mxu0 0.0
      %1013 = vmatprep.subr.mxu0 0.0
      %1014 = vmatpush1.msra.mxu0 0.0
      %1015 = vmatprep.subr.mxu0 0.0
      %1016 = vmatpush1.msra.mxu0 0.0
      %1017 = vmatprep.subr.mxu0 0.0
      %1018 = vmatpush1.msra.mxu0 0.0
      %1019 = vmatprep.subr.mxu0 0.0
      %1020 = vmatpush1.msra.mxu0 0.0
      %1021 = vmatprep.subr.mxu0 0.0
      %1022 = vmatpush1.msra.mxu0 0.0
      %1023 = vmatprep.mubr.f32.mxu0 0.0
      %1024 = vmatmul.mubr.f32.gmra.mrb[0].mxu0 %v957
      %v1025 = vpop.f32.mrb[0].mxu0
      %v1026 = vadd.f32 %v872, %v1025
      %v1027 = vpop.f32.mrb[0].mxu0
      %v1028 = vadd.f32 %v874, %v1027
      %1029 = vdwg.mxu0
      %v1030 = vld [vmem:[#allocation2 + $0x8] sm:$0xff]
      %v1031 = vld [vmem:[#allocation2 + $0x10] sm:$0xff]
      %v1032 = vld [vmem:[#allocation2 + $0x18] sm:$0xff]
      %v1033 = vld [vmem:[#allocation2 + $0x28] sm:$0xff]
      %v1034 = vld [vmem:[#allocation2 + $0x30] sm:$0xff]
      %v1035 = vld [vmem:[#allocation2 + $0x38] sm:$0xff]
      %v1036 = vld [vmem:[#allocation2 + $0x48] sm:$0xff]
      %v1037 = vld [vmem:[#allocation2 + $0x50] sm:$0xff]
      %v1038 = vld [vmem:[#allocation2 + $0x58] sm:$0xff]
      %v1039 = vld [vmem:[#allocation2 + $0x68] sm:$0xff]
      %v1040 = vld [vmem:[#allocation2 + $0x70] sm:$0xff]
      %v1041 = vld [vmem:[#allocation2 + $0x78] sm:$0xff]
      %v1042 = vld [vmem:[#allocation2 + $0x88] sm:$0xff]
      %v1043 = vld [vmem:[#allocation2 + $0x90] sm:$0xff]
      %v1044 = vld [vmem:[#allocation2 + $0x98] sm:$0xff]
      %v1045 = vld [vmem:[#allocation2 + $0xa8] sm:$0xff]
      %v1046 = vld [vmem:[#allocation2 + $0xb0] sm:$0xff]
      %v1047 = vld [vmem:[#allocation2 + $0xb8] sm:$0xff]
      %v1048 = vld [vmem:[#allocation2 + $0xc8] sm:$0xff]
      %v1049 = vld [vmem:[#allocation2 + $0xd0] sm:$0xff]
      %v1050 = vld [vmem:[#allocation2 + $0xd8] sm:$0xff]
      %v1051 = vld [vmem:[#allocation2 + $0xe8] sm:$0xff]
      %v1052 = vld [vmem:[#allocation2 + $0xf0] sm:$0xff]
      %v1053 = vld [vmem:[#allocation2 + $0xf8] sm:$0xff]
      %s1054 = scalar_lea.vmem %s3, 12
      %v1055 = vld [vmem:[%s1054] sm:$0x3]
      %1080 = vrot.lane.b32.xlu0 %v1030, 113
      %v1081 = vpop.permute.xlu0 %1080
      %1082 = vrot.lane.b32.xlu0 %v1031, 113
      %v1083 = vpop.permute.xlu0 %1082
      %1084 = vrot.lane.b32.xlu0 %v1032, 113
      %v1085 = vpop.permute.xlu0 %1084
      %1086 = vrot.lane.b32.xlu0 %v1033, 113
      %v1087 = vpop.permute.xlu0 %1086
      %1088 = vrot.lane.b32.xlu0 %v1034, 113
      %v1089 = vpop.permute.xlu0 %1088
      %1090 = vrot.lane.b32.xlu0 %v1035, 113
      %v1091 = vpop.permute.xlu0 %1090
      %1092 = vrot.lane.b32.xlu0 %v1036, 113
      %v1093 = vpop.permute.xlu0 %1092
      %1094 = vrot.lane.b32.xlu0 %v1037, 113
      %v1095 = vpop.permute.xlu0 %1094
      %1096 = vrot.lane.b32.xlu0 %v1038, 113
      %v1097 = vpop.permute.xlu0 %1096
      %1098 = vrot.lane.b32.xlu0 %v1039, 113
      %v1099 = vpop.permute.xlu0 %1098
      %1100 = vrot.lane.b32.xlu0 %v1040, 113
      %v1101 = vpop.permute.xlu0 %1100
      %1102 = vrot.lane.b32.xlu0 %v1041, 113
      %v1103 = vpop.permute.xlu0 %1102
      %1104 = vrot.lane.b32.xlu0 %v1042, 113
      %v1105 = vpop.permute.xlu0 %1104
      %1106 = vrot.lane.b32.xlu0 %v1043, 113
      %v1107 = vpop.permute.xlu0 %1106
      %1108 = vrot.lane.b32.xlu0 %v1044, 113
      %v1109 = vpop.permute.xlu0 %1108
      %1110 = vrot.lane.b32.xlu0 %v1045, 113
      %v1111 = vpop.permute.xlu0 %1110
      %1112 = vrot.lane.b32.xlu0 %v1046, 113
      %v1113 = vpop.permute.xlu0 %1112
      %1114 = vrot.lane.b32.xlu0 %v1047, 113
      %v1115 = vpop.permute.xlu0 %1114
      %1116 = vrot.lane.b32.xlu0 %v1048, 113
      %v1117 = vpop.permute.xlu0 %1116
      %1118 = vrot.lane.b32.xlu0 %v1049, 113
      %v1119 = vpop.permute.xlu0 %1118
      %1120 = vrot.lane.b32.xlu0 %v1050, 113
      %v1121 = vpop.permute.xlu0 %1120
      %1122 = vrot.lane.b32.xlu0 %v1051, 113
      %v1123 = vpop.permute.xlu0 %1122
      %1124 = vrot.lane.b32.xlu0 %v1052, 113
      %v1125 = vpop.permute.xlu0 %1124
      %1126 = vrot.lane.b32.xlu0 %v1053, 113
      %v1127 = vpop.permute.xlu0 %1126
      %v1128 = vsel %vm340, %v1081, %v1083
      %v1129 = vsel %vm340, %v1083, %v1085
      %v1130 = vsel %vm340, %v1087, %v1089
      %v1131 = vsel %vm340, %v1089, %v1091
      %v1132 = vsel %vm340, %v1093, %v1095
      %v1133 = vsel %vm340, %v1095, %v1097
      %v1134 = vsel %vm340, %v1099, %v1101
      %v1135 = vsel %vm340, %v1101, %v1103
      %v1136 = vsel %vm340, %v1105, %v1107
      %v1137 = vsel %vm340, %v1107, %v1109
      %v1138 = vsel %vm340, %v1111, %v1113
      %v1139 = vsel %vm340, %v1113, %v1115
      %v1140 = vsel %vm340, %v1117, %v1119
      %v1141 = vsel %vm340, %v1119, %v1121
      %v1142 = vsel %vm340, %v1123, %v1125
      %v1143 = vsel %vm340, %v1125, %v1127
      %v1161 = vsel %vm801, %v1055, 0
      %1163 = vmatprep.subr.mxu0 %v1129
      %1164 = vmatpush1.msra.mxu0 %v1128
      %1165 = vmatprep.subr.mxu0 %v1131
      %1166 = vmatpush1.msra.mxu0 %v1130
      %1167 = vmatprep.subr.mxu0 %v1133
      %1168 = vmatpush1.msra.mxu0 %v1132
      %1169 = vmatprep.subr.mxu0 %v1135
      %1170 = vmatpush1.msra.mxu0 %v1134
      %1171 = vmatprep.subr.mxu0 %v1137
      %1172 = vmatpush1.msra.mxu0 %v1136
      %1173 = vmatprep.subr.mxu0 %v1139
      %1174 = vmatpush1.msra.mxu0 %v1138
      %1175 = vmatprep.subr.mxu0 %v1141
      %1176 = vmatpush1.msra.mxu0 %v1140
      %1177 = vmatprep.subr.mxu0 %v1143
      %1178 = vmatpush1.msra.mxu0 %v1142
      %1179 = vmatprep.subr.mxu0 0.0
      %1180 = vmatpush1.msra.mxu0 0.0
      %1181 = vmatprep.subr.mxu0 0.0
      %1182 = vmatpush1.msra.mxu0 0.0
      %1183 = vmatprep.subr.mxu0 0.0
      %1184 = vmatpush1.msra.mxu0 0.0
      %1185 = vmatprep.subr.mxu0 0.0
      %1186 = vmatpush1.msra.mxu0 0.0
      %1187 = vmatprep.subr.mxu0 0.0
      %1188 = vmatpush1.msra.mxu0 0.0
      %1189 = vmatprep.subr.mxu0 0.0
      %1190 = vmatpush1.msra.mxu0 0.0
      %1191 = vmatprep.subr.mxu0 0.0
      %1192 = vmatpush1.msra.mxu0 0.0
      %1193 = vmatprep.subr.mxu0 0.0
      %1194 = vmatpush1.msra.mxu0 0.0
      %1195 = vmatprep.subr.mxu0 0.0
      %1196 = vmatpush1.msra.mxu0 0.0
      %1197 = vmatprep.subr.mxu0 0.0
      %1198 = vmatpush1.msra.mxu0 0.0
      %1199 = vmatprep.subr.mxu0 0.0
      %1200 = vmatpush1.msra.mxu0 0.0
      %1201 = vmatprep.subr.mxu0 0.0
      %1202 = vmatpush1.msra.mxu0 0.0
      %1203 = vmatprep.subr.mxu0 0.0
      %1204 = vmatpush1.msra.mxu0 0.0
      %1205 = vmatprep.subr.mxu0 0.0
      %1206 = vmatpush1.msra.mxu0 0.0
      %1207 = vmatprep.subr.mxu0 0.0
      %1208 = vmatpush1.msra.mxu0 0.0
      %1209 = vmatprep.subr.mxu0 0.0
      %1210 = vmatpush1.msra.mxu0 0.0
      %1211 = vmatprep.subr.mxu0 0.0
      %1212 = vmatpush1.msra.mxu0 0.0
      %1213 = vmatprep.subr.mxu0 0.0
      %1214 = vmatpush1.msra.mxu0 0.0
      %1215 = vmatprep.subr.mxu0 0.0
      %1216 = vmatpush1.msra.mxu0 0.0
      %1217 = vmatprep.subr.mxu0 0.0
      %1218 = vmatpush1.msra.mxu0 0.0
      %1219 = vmatprep.subr.mxu0 0.0
      %1220 = vmatpush1.msra.mxu0 0.0
      %1221 = vmatprep.subr.mxu0 0.0
      %1222 = vmatpush1.msra.mxu0 0.0
      %1223 = vmatprep.subr.mxu0 0.0
      %1224 = vmatpush1.msra.mxu0 0.0
      %1225 = vmatprep.subr.mxu0 0.0
      %1226 = vmatpush1.msra.mxu0 0.0
      %1227 = vmatprep.mubr.f32.mxu0 0.0
      %1228 = vmatmul.mubr.f32.gmra.mrb[0].mxu0 %v1161
      %v1229 = vpop.f32.mrb[0].mxu0
      %v1230 = vadd.f32 0.0, %v1229
      %v1231 = vpop.f32.mrb[0].mxu0
      %v1232 = vadd.f32 0.0, %v1231
      %1233 = vdwg.mxu0
      %v1234 = vadd.f32 %v1026, %v1230
      %v1235 = vadd.f32 %v1028, %v1232
      %v1236 = vsel %vm249, 1, 0
      %v1237 = vsel %vm250, 1, 0
      %vm1238 = vcmp.eq.s32.totalorder %v1236, 1
      %vm1239 = vcmp.eq.s32.totalorder %v1237, 1
      %v1240 = vsel %vm1238, %v1234, 0.0
      %v1241 = vsel %vm1239, %v1235, 0.0
      %v1242 = vadd.f32 %v1240, 0.0
      %v1243 = vadd.f32 %v1241, 0.0
      %s1244 = scalar_lea.vmem %s3, 2
      %v1245 = vld [vmem:[%s1244] sm:$0x3]
      %s1246 = scalar_lea.vmem %s3, 8
      %v1247 = vld [vmem:[%s1246] sm:$0x3]
      %v1249 = vsel %vm801, %v1247, 0
      %1251 = vmatprep.subr.mxu0 %v672
      %1252 = vmatpush1.msra.mxu0 %v671
      %1253 = vmatprep.subr.mxu0 %v675
      %1254 = vmatpush1.msra.mxu0 %v674
      %1255 = vmatprep.subr.mxu0 %v678
      %1256 = vmatpush1.msra.mxu0 %v677
      %1257 = vmatprep.subr.mxu0 %v681
      %1258 = vmatpush1.msra.mxu0 %v680
      %1259 = vmatprep.subr.mxu0 %v684
      %1260 = vmatpush1.msra.mxu0 %v683
      %1261 = vmatprep.subr.mxu0 %v687
      %1262 = vmatpush1.msra.mxu0 %v686
      %1263 = vmatprep.subr.mxu0 %v690
      %1264 = vmatpush1.msra.mxu0 %v689
      %1265 = vmatprep.subr.mxu0 %v693
      %1266 = vmatpush1.msra.mxu0 %v692
      %1267 = vmatprep.subr.mxu0 0.0
      %1268 = vmatpush1.msra.mxu0 0.0
      %1269 = vmatprep.subr.mxu0 0.0
      %1270 = vmatpush1.msra.mxu0 0.0
      %1271 = vmatprep.subr.mxu0 0.0
      %1272 = vmatpush1.msra.mxu0 0.0
      %1273 = vmatprep.subr.mxu0 0.0
      %1274 = vmatpush1.msra.mxu0 0.0
      %1275 = vmatprep.subr.mxu0 0.0
      %1276 = vmatpush1.msra.mxu0 0.0
      %1277 = vmatprep.subr.mxu0 0.0
      %1278 = vmatpush1.msra.mxu0 0.0
      %1279 = vmatprep.subr.mxu0 0.0
      %1280 = vmatpush1.msra.mxu0 0.0
      %1281 = vmatprep.subr.mxu0 0.0
      %1282 = vmatpush1.msra.mxu0 0.0
      %1283 = vmatprep.subr.mxu0 0.0
      %1284 = vmatpush1.msra.mxu0 0.0
      %1285 = vmatprep.subr.mxu0 0.0
      %1286 = vmatpush1.msra.mxu0 0.0
      %1287 = vmatprep.subr.mxu0 0.0
      %1288 = vmatpush1.msra.mxu0 0.0
      %1289 = vmatprep.subr.mxu0 0.0
      %1290 = vmatpush1.msra.mxu0 0.0
      %1291 = vmatprep.subr.mxu0 0.0
      %1292 = vmatpush1.msra.mxu0 0.0
      %1293 = vmatprep.subr.mxu0 0.0
      %1294 = vmatpush1.msra.mxu0 0.0
      %1295 = vmatprep.subr.mxu0 0.0
      %1296 = vmatpush1.msra.mxu0 0.0
      %1297 = vmatprep.subr.mxu0 0.0
      %1298 = vmatpush1.msra.mxu0 0.0
      %1299 = vmatprep.subr.mxu0 0.0
      %1300 = vmatpush1.msra.mxu0 0.0
      %1301 = vmatprep.subr.mxu0 0.0
      %1302 = vmatpush1.msra.mxu0 0.0
      %1303 = vmatprep.subr.mxu0 0.0
      %1304 = vmatpush1.msra.mxu0 0.0
      %1305 = vmatprep.subr.mxu0 0.0
      %1306 = vmatpush1.msra.mxu0 0.0
      %1307 = vmatprep.subr.mxu0 0.0
      %1308 = vmatpush1.msra.mxu0 0.0
      %1309 = vmatprep.subr.mxu0 0.0
      %1310 = vmatpush1.msra.mxu0 0.0
      %1311 = vmatprep.subr.mxu0 0.0
      %1312 = vmatpush1.msra.mxu0 0.0
      %1313 = vmatprep.subr.mxu0 0.0
      %1314 = vmatpush1.msra.mxu0 0.0
      %1315 = vmatprep.mubr.f32.mxu0 0.0
      %1316 = vmatmul.mubr.f32.gmra.mrb[0].mxu0 %v1249
      %v1317 = vpop.f32.mrb[0].mxu0
      %v1318 = vadd.f32 0.0, %v1317
      %v1319 = vpop.f32.mrb[0].mxu0
      %v1320 = vadd.f32 0.0, %v1319
      %1321 = vdwg.mxu0
      %1322 = vrot.lane.b32.xlu0 %v670, 16
      %v1323 = vpop.permute.xlu0 %1322
      %1324 = vrot.lane.b32.xlu0 %v671, 16
      %v1325 = vpop.permute.xlu0 %1324
      %1326 = vrot.lane.b32.xlu0 %v672, 16
      %v1327 = vpop.permute.xlu0 %1326
      %1328 = vrot.lane.b32.xlu0 %v673, 16
      %v1329 = vpop.permute.xlu0 %1328
      %1330 = vrot.lane.b32.xlu0 %v674, 16
      %v1331 = vpop.permute.xlu0 %1330
      %1332 = vrot.lane.b32.xlu0 %v675, 16
      %v1333 = vpop.permute.xlu0 %1332
      %1334 = vrot.lane.b32.xlu0 %v676, 16
      %v1335 = vpop.permute.xlu0 %1334
      %1336 = vrot.lane.b32.xlu0 %v677, 16
      %v1337 = vpop.permute.xlu0 %1336
      %1338 = vrot.lane.b32.xlu0 %v678, 16
      %v1339 = vpop.permute.xlu0 %1338
      %1340 = vrot.lane.b32.xlu0 %v679, 16
      %v1341 = vpop.permute.xlu0 %1340
      %1342 = vrot.lane.b32.xlu0 %v680, 16
      %v1343 = vpop.permute.xlu0 %1342
      %1344 = vrot.lane.b32.xlu0 %v681, 16
      %v1345 = vpop.permute.xlu0 %1344
      %1346 = vrot.lane.b32.xlu0 %v682, 16
      %v1347 = vpop.permute.xlu0 %1346
      %1348 = vrot.lane.b32.xlu0 %v683, 16
      %v1349 = vpop.permute.xlu0 %1348
      %1350 = vrot.lane.b32.xlu0 %v684, 16
      %v1351 = vpop.permute.xlu0 %1350
      %1352 = vrot.lane.b32.xlu0 %v685, 16
      %v1353 = vpop.permute.xlu0 %1352
      %1354 = vrot.lane.b32.xlu0 %v686, 16
      %v1355 = vpop.permute.xlu0 %1354
      %1356 = vrot.lane.b32.xlu0 %v687, 16
      %v1357 = vpop.permute.xlu0 %1356
      %1358 = vrot.lane.b32.xlu0 %v688, 16
      %v1359 = vpop.permute.xlu0 %1358
      %1360 = vrot.lane.b32.xlu0 %v689, 16
      %v1361 = vpop.permute.xlu0 %1360
      %1362 = vrot.lane.b32.xlu0 %v690, 16
      %v1363 = vpop.permute.xlu0 %1362
      %1364 = vrot.lane.b32.xlu0 %v691, 16
      %v1365 = vpop.permute.xlu0 %1364
      %1366 = vrot.lane.b32.xlu0 %v692, 16
      %v1367 = vpop.permute.xlu0 %1366
      %1368 = vrot.lane.b32.xlu0 %v693, 16
      %v1369 = vpop.permute.xlu0 %1368
      %v1370 = vsel %vm366, %v1323, %v1325
      %v1371 = vsel %vm366, %v1325, %v1327
      %v1372 = vsel %vm366, %v1329, %v1331
      %v1373 = vsel %vm366, %v1331, %v1333
      %v1374 = vsel %vm366, %v1335, %v1337
      %v1375 = vsel %vm366, %v1337, %v1339
      %v1376 = vsel %vm366, %v1341, %v1343
      %v1377 = vsel %vm366, %v1343, %v1345
      %v1378 = vsel %vm366, %v1347, %v1349
      %v1379 = vsel %vm366, %v1349, %v1351
      %v1380 = vsel %vm366, %v1353, %v1355
      %v1381 = vsel %vm366, %v1355, %v1357
      %v1382 = vsel %vm366, %v1359, %v1361
      %v1383 = vsel %vm366, %v1361, %v1363
      %v1384 = vsel %vm366, %v1365, %v1367
      %v1385 = vsel %vm366, %v1367, %v1369
      %v1403 = vsel %vm801, %v1245, 0
      %1405 = vmatprep.subr.mxu0 %v1371
      %1406 = vmatpush1.msra.mxu0 %v1370
      %1407 = vmatprep.subr.mxu0 %v1373
      %1408 = vmatpush1.msra.mxu0 %v1372
      %1409 = vmatprep.subr.mxu0 %v1375
      %1410 = vmatpush1.msra.mxu0 %v1374
      %1411 = vmatprep.subr.mxu0 %v1377
      %1412 = vmatpush1.msra.mxu0 %v1376
      %1413 = vmatprep.subr.mxu0 %v1379
      %1414 = vmatpush1.msra.mxu0 %v1378
      %1415 = vmatprep.subr.mxu0 %v1381
      %1416 = vmatpush1.msra.mxu0 %v1380
      %1417 = vmatprep.subr.mxu0 %v1383
      %1418 = vmatpush1.msra.mxu0 %v1382
      %1419 = vmatprep.subr.mxu0 %v1385
      %1420 = vmatpush1.msra.mxu0 %v1384
      %1421 = vmatprep.subr.mxu0 0.0
      %1422 = vmatpush1.msra.mxu0 0.0
      %1423 = vmatprep.subr.mxu0 0.0
      %1424 = vmatpush1.msra.mxu0 0.0
      %1425 = vmatprep.subr.mxu0 0.0
      %1426 = vmatpush1.msra.mxu0 0.0
      %1427 = vmatprep.subr.mxu0 0.0
      %1428 = vmatpush1.msra.mxu0 0.0
      %1429 = vmatprep.subr.mxu0 0.0
      %1430 = vmatpush1.msra.mxu0 0.0
      %1431 = vmatprep.subr.mxu0 0.0
      %1432 = vmatpush1.msra.mxu0 0.0
      %1433 = vmatprep.subr.mxu0 0.0
      %1434 = vmatpush1.msra.mxu0 0.0
      %1435 = vmatprep.subr.mxu0 0.0
      %1436 = vmatpush1.msra.mxu0 0.0
      %1437 = vmatprep.subr.mxu0 0.0
      %1438 = vmatpush1.msra.mxu0 0.0
      %1439 = vmatprep.subr.mxu0 0.0
      %1440 = vmatpush1.msra.mxu0 0.0
      %1441 = vmatprep.subr.mxu0 0.0
      %1442 = vmatpush1.msra.mxu0 0.0
      %1443 = vmatprep.subr.mxu0 0.0
      %1444 = vmatpush1.msra.mxu0 0.0
      %1445 = vmatprep.subr.mxu0 0.0
      %1446 = vmatpush1.msra.mxu0 0.0
      %1447 = vmatprep.subr.mxu0 0.0
      %1448 = vmatpush1.msra.mxu0 0.0
      %1449 = vmatprep.subr.mxu0 0.0
      %1450 = vmatpush1.msra.mxu0 0.0
      %1451 = vmatprep.subr.mxu0 0.0
      %1452 = vmatpush1.msra.mxu0 0.0
      %1453 = vmatprep.subr.mxu0 0.0
      %1454 = vmatpush1.msra.mxu0 0.0
      %1455 = vmatprep.subr.mxu0 0.0
      %1456 = vmatpush1.msra.mxu0 0.0
      %1457 = vmatprep.subr.mxu0 0.0
      %1458 = vmatpush1.msra.mxu0 0.0
      %1459 = vmatprep.subr.mxu0 0.0
      %1460 = vmatpush1.msra.mxu0 0.0
      %1461 = vmatprep.subr.mxu0 0.0
      %1462 = vmatpush1.msra.mxu0 0.0
      %1463 = vmatprep.subr.mxu0 0.0
      %1464 = vmatpush1.msra.mxu0 0.0
      %1465 = vmatprep.subr.mxu0 0.0
      %1466 = vmatpush1.msra.mxu0 0.0
      %1467 = vmatprep.subr.mxu0 0.0
      %1468 = vmatpush1.msra.mxu0 0.0
      %1469 = vmatprep.mubr.f32.mxu0 0.0
      %1470 = vmatmul.mubr.f32.gmra.mrb[0].mxu0 %v1403
      %v1471 = vpop.f32.mrb[0].mxu0
      %v1472 = vadd.f32 %v1318, %v1471
      %v1473 = vpop.f32.mrb[0].mxu0
      %v1474 = vadd.f32 %v1320, %v1473
      %1475 = vdwg.mxu0
      %s1476 = scalar_lea.vmem %s3, 14
      %v1477 = vld [vmem:[%s1476] sm:$0x3]
      %1478 = vrot.lane.b32.xlu0 %v1030, 112
      %v1479 = vpop.permute.xlu0 %1478
      %1480 = vrot.lane.b32.xlu0 %v1031, 112
      %v1481 = vpop.permute.xlu0 %1480
      %1482 = vrot.lane.b32.xlu0 %v1032, 112
      %v1483 = vpop.permute.xlu0 %1482
      %1484 = vrot.lane.b32.xlu0 %v1033, 112
      %v1485 = vpop.permute.xlu0 %1484
      %1486 = vrot.lane.b32.xlu0 %v1034, 112
      %v1487 = vpop.permute.xlu0 %1486
      %1488 = vrot.lane.b32.xlu0 %v1035, 112
      %v1489 = vpop.permute.xlu0 %1488
      %1490 = vrot.lane.b32.xlu0 %v1036, 112
      %v1491 = vpop.permute.xlu0 %1490
      %1492 = vrot.lane.b32.xlu0 %v1037, 112
      %v1493 = vpop.permute.xlu0 %1492
      %1494 = vrot.lane.b32.xlu0 %v1038, 112
      %v1495 = vpop.permute.xlu0 %1494
      %1496 = vrot.lane.b32.xlu0 %v1039, 112
      %v1497 = vpop.permute.xlu0 %1496
      %1498 = vrot.lane.b32.xlu0 %v1040, 112
      %v1499 = vpop.permute.xlu0 %1498
      %1500 = vrot.lane.b32.xlu0 %v1041, 112
      %v1501 = vpop.permute.xlu0 %1500
      %1502 = vrot.lane.b32.xlu0 %v1042, 112
      %v1503 = vpop.permute.xlu0 %1502
      %1504 = vrot.lane.b32.xlu0 %v1043, 112
      %v1505 = vpop.permute.xlu0 %1504
      %1506 = vrot.lane.b32.xlu0 %v1044, 112
      %v1507 = vpop.permute.xlu0 %1506
      %1508 = vrot.lane.b32.xlu0 %v1045, 112
      %v1509 = vpop.permute.xlu0 %1508
      %1510 = vrot.lane.b32.xlu0 %v1046, 112
      %v1511 = vpop.permute.xlu0 %1510
      %1512 = vrot.lane.b32.xlu0 %v1047, 112
      %v1513 = vpop.permute.xlu0 %1512
      %1514 = vrot.lane.b32.xlu0 %v1048, 112
      %v1515 = vpop.permute.xlu0 %1514
      %1516 = vrot.lane.b32.xlu0 %v1049, 112
      %v1517 = vpop.permute.xlu0 %1516
      %1518 = vrot.lane.b32.xlu0 %v1050, 112
      %v1519 = vpop.permute.xlu0 %1518
      %1520 = vrot.lane.b32.xlu0 %v1051, 112
      %v1521 = vpop.permute.xlu0 %1520
      %1522 = vrot.lane.b32.xlu0 %v1052, 112
      %v1523 = vpop.permute.xlu0 %1522
      %1524 = vrot.lane.b32.xlu0 %v1053, 112
      %v1525 = vpop.permute.xlu0 %1524
      %v1526 = vsel %vm412, %v1479, %v1481
      %v1527 = vsel %vm412, %v1481, %v1483
      %v1528 = vsel %vm412, %v1485, %v1487
      %v1529 = vsel %vm412, %v1487, %v1489
      %v1530 = vsel %vm412, %v1491, %v1493
      %v1531 = vsel %vm412, %v1493, %v1495
      %v1532 = vsel %vm412, %v1497, %v1499
      %v1533 = vsel %vm412, %v1499, %v1501
      %v1534 = vsel %vm412, %v1503, %v1505
      %v1535 = vsel %vm412, %v1505, %v1507
      %v1536 = vsel %vm412, %v1509, %v1511
      %v1537 = vsel %vm412, %v1511, %v1513
      %v1538 = vsel %vm412, %v1515, %v1517
      %v1539 = vsel %vm412, %v1517, %v1519
      %v1540 = vsel %vm412, %v1521, %v1523
      %v1541 = vsel %vm412, %v1523, %v1525
      %v1559 = vsel %vm801, %v1477, 0
      %1561 = vmatprep.subr.mxu0 %v1527
      %1562 = vmatpush1.msra.mxu0 %v1526
      %1563 = vmatprep.subr.mxu0 %v1529
      %1564 = vmatpush1.msra.mxu0 %v1528
      %1565 = vmatprep.subr.mxu0 %v1531
      %1566 = vmatpush1.msra.mxu0 %v1530
      %1567 = vmatprep.subr.mxu0 %v1533
      %1568 = vmatpush1.msra.mxu0 %v1532
      %1569 = vmatprep.subr.mxu0 %v1535
      %1570 = vmatpush1.msra.mxu0 %v1534
      %1571 = vmatprep.subr.mxu0 %v1537
      %1572 = vmatpush1.msra.mxu0 %v1536
      %1573 = vmatprep.subr.mxu0 %v1539
      %1574 = vmatpush1.msra.mxu0 %v1538
      %1575 = vmatprep.subr.mxu0 %v1541
      %1576 = vmatpush1.msra.mxu0 %v1540
      %1577 = vmatprep.subr.mxu0 0.0
      %1578 = vmatpush1.msra.mxu0 0.0
      %1579 = vmatprep.subr.mxu0 0.0
      %1580 = vmatpush1.msra.mxu0 0.0
      %1581 = vmatprep.subr.mxu0 0.0
      %1582 = vmatpush1.msra.mxu0 0.0
      %1583 = vmatprep.subr.mxu0 0.0
      %1584 = vmatpush1.msra.mxu0 0.0
      %1585 = vmatprep.subr.mxu0 0.0
      %1586 = vmatpush1.msra.mxu0 0.0
      %1587 = vmatprep.subr.mxu0 0.0
      %1588 = vmatpush1.msra.mxu0 0.0
      %1589 = vmatprep.subr.mxu0 0.0
      %1590 = vmatpush1.msra.mxu0 0.0
      %1591 = vmatprep.subr.mxu0 0.0
      %1592 = vmatpush1.msra.mxu0 0.0
      %1593 = vmatprep.subr.mxu0 0.0
      %1594 = vmatpush1.msra.mxu0 0.0
      %1595 = vmatprep.subr.mxu0 0.0
      %1596 = vmatpush1.msra.mxu0 0.0
      %1597 = vmatprep.subr.mxu0 0.0
      %1598 = vmatpush1.msra.mxu0 0.0
      %1599 = vmatprep.subr.mxu0 0.0
      %1600 = vmatpush1.msra.mxu0 0.0
      %1601 = vmatprep.subr.mxu0 0.0
      %1602 = vmatpush1.msra.mxu0 0.0
      %1603 = vmatprep.subr.mxu0 0.0
      %1604 = vmatpush1.msra.mxu0 0.0
      %1605 = vmatprep.subr.mxu0 0.0
      %1606 = vmatpush1.msra.mxu0 0.0
      %1607 = vmatprep.subr.mxu0 0.0
      %1608 = vmatpush1.msra.mxu0 0.0
      %1609 = vmatprep.subr.mxu0 0.0
      %1610 = vmatpush1.msra.mxu0 0.0
      %1611 = vmatprep.subr.mxu0 0.0
      %1612 = vmatpush1.msra.mxu0 0.0
      %1613 = vmatprep.subr.mxu0 0.0
      %1614 = vmatpush1.msra.mxu0 0.0
      %1615 = vmatprep.subr.mxu0 0.0
      %1616 = vmatpush1.msra.mxu0 0.0
      %1617 = vmatprep.subr.mxu0 0.0
      %1618 = vmatpush1.msra.mxu0 0.0
      %1619 = vmatprep.subr.mxu0 0.0
      %1620 = vmatpush1.msra.mxu0 0.0
      %1621 = vmatprep.subr.mxu0 0.0
      %1622 = vmatpush1.msra.mxu0 0.0
      %1623 = vmatprep.subr.mxu0 0.0
      %1624 = vmatpush1.msra.mxu0 0.0
      %1625 = vmatprep.mubr.f32.mxu0 0.0
      %1626 = vmatmul.mubr.f32.gmra.mrb[0].mxu0 %v1559
      %v1627 = vpop.f32.mrb[0].mxu0
      %v1628 = vadd.f32 0.0, %v1627
      %v1629 = vpop.f32.mrb[0].mxu0
      %v1630 = vadd.f32 0.0, %v1629
      %1631 = vdwg.mxu0
      %v1632 = vadd.f32 %v1472, %v1628
      %v1633 = vadd.f32 %v1474, %v1630
      %v1634 = vadd.f32 %v1242, %v1632
      %v1635 = vadd.f32 %v1243, %v1633
      %s1636 = scalar_lea.vmem %s3, 4
      %v1637 = vld [vmem:[%s1636] sm:$0x3]
      %s1638 = scalar_lea.vmem %s3, 10
      %v1639 = vld [vmem:[%s1638] sm:$0x3]
      %1640 = vrot.lane.b32.xlu0 %v1030, 127
      %v1641 = vpop.permute.xlu0 %1640
      %1642 = vrot.lane.b32.xlu0 %v1031, 127
      %v1643 = vpop.permute.xlu0 %1642
      %1644 = vrot.lane.b32.xlu0 %v1032, 127
      %v1645 = vpop.permute.xlu0 %1644
      %1646 = vrot.lane.b32.xlu0 %v1033, 127
      %v1647 = vpop.permute.xlu0 %1646
      %1648 = vrot.lane.b32.xlu0 %v1034, 127
      %v1649 = vpop.permute.xlu0 %1648
      %1650 = vrot.lane.b32.xlu0 %v1035, 127
      %v1651 = vpop.permute.xlu0 %1650
      %1652 = vrot.lane.b32.xlu0 %v1036, 127
      %v1653 = vpop.permute.xlu0 %1652
      %1654 = vrot.lane.b32.xlu0 %v1037, 127
      %v1655 = vpop.permute.xlu0 %1654
      %1656 = vrot.lane.b32.xlu0 %v1038, 127
      %v1657 = vpop.permute.xlu0 %1656
      %1658 = vrot.lane.b32.xlu0 %v1039, 127
      %v1659 = vpop.permute.xlu0 %1658
      %1660 = vrot.lane.b32.xlu0 %v1040, 127
      %v1661 = vpop.permute.xlu0 %1660
      %1662 = vrot.lane.b32.xlu0 %v1041, 127
      %v1663 = vpop.permute.xlu0 %1662
      %1664 = vrot.lane.b32.xlu0 %v1042, 127
      %v1665 = vpop.permute.xlu0 %1664
      %1666 = vrot.lane.b32.xlu0 %v1043, 127
      %v1667 = vpop.permute.xlu0 %1666
      %1668 = vrot.lane.b32.xlu0 %v1044, 127
      %v1669 = vpop.permute.xlu0 %1668
      %1670 = vrot.lane.b32.xlu0 %v1045, 127
      %v1671 = vpop.permute.xlu0 %1670
      %1672 = vrot.lane.b32.xlu0 %v1046, 127
      %v1673 = vpop.permute.xlu0 %1672
      %1674 = vrot.lane.b32.xlu0 %v1047, 127
      %v1675 = vpop.permute.xlu0 %1674
      %1676 = vrot.lane.b32.xlu0 %v1048, 127
      %v1677 = vpop.permute.xlu0 %1676
      %1678 = vrot.lane.b32.xlu0 %v1049, 127
      %v1679 = vpop.permute.xlu0 %1678
      %1680 = vrot.lane.b32.xlu0 %v1050, 127
      %v1681 = vpop.permute.xlu0 %1680
      %1682 = vrot.lane.b32.xlu0 %v1051, 127
      %v1683 = vpop.permute.xlu0 %1682
      %1684 = vrot.lane.b32.xlu0 %v1052, 127
      %v1685 = vpop.permute.xlu0 %1684
      %1686 = vrot.lane.b32.xlu0 %v1053, 127
      %v1687 = vpop.permute.xlu0 %1686
      %v1688 = vsel %vm327, %v1641, %v1643
      %v1689 = vsel %vm327, %v1643, %v1645
      %v1690 = vsel %vm327, %v1647, %v1649
      %v1691 = vsel %vm327, %v1649, %v1651
      %v1692 = vsel %vm327, %v1653, %v1655
      %v1693 = vsel %vm327, %v1655, %v1657
      %v1694 = vsel %vm327, %v1659, %v1661
      %v1695 = vsel %vm327, %v1661, %v1663
      %v1696 = vsel %vm327, %v1665, %v1667
      %v1697 = vsel %vm327, %v1667, %v1669
      %v1698 = vsel %vm327, %v1671, %v1673
      %v1699 = vsel %vm327, %v1673, %v1675
      %v1700 = vsel %vm327, %v1677, %v1679
      %v1701 = vsel %vm327, %v1679, %v1681
      %v1702 = vsel %vm327, %v1683, %v1685
      %v1703 = vsel %vm327, %v1685, %v1687
      %v1721 = vsel %vm801, %v1639, 0
      %1723 = vmatprep.subr.mxu0 %v1689
      %1724 = vmatpush1.msra.mxu0 %v1688
      %1725 = vmatprep.subr.mxu0 %v1691
      %1726 = vmatpush1.msra.mxu0 %v1690
      %1727 = vmatprep.subr.mxu0 %v1693
      %1728 = vmatpush1.msra.mxu0 %v1692
      %1729 = vmatprep.subr.mxu0 %v1695
      %1730 = vmatpush1.msra.mxu0 %v1694
      %1731 = vmatprep.subr.mxu0 %v1697
      %1732 = vmatpush1.msra.mxu0 %v1696
      %1733 = vmatprep.subr.mxu0 %v1699
      %1734 = vmatpush1.msra.mxu0 %v1698
      %1735 = vmatprep.subr.mxu0 %v1701
      %1736 = vmatpush1.msra.mxu0 %v1700
      %1737 = vmatprep.subr.mxu0 %v1703
      %1738 = vmatpush1.msra.mxu0 %v1702
      %1739 = vmatprep.subr.mxu0 0.0
      %1740 = vmatpush1.msra.mxu0 0.0
      %1741 = vmatprep.subr.mxu0 0.0
      %1742 = vmatpush1.msra.mxu0 0.0
      %1743 = vmatprep.subr.mxu0 0.0
      %1744 = vmatpush1.msra.mxu0 0.0
      %1745 = vmatprep.subr.mxu0 0.0
      %1746 = vmatpush1.msra.mxu0 0.0
      %1747 = vmatprep.subr.mxu0 0.0
      %1748 = vmatpush1.msra.mxu0 0.0
      %1749 = vmatprep.subr.mxu0 0.0
      %1750 = vmatpush1.msra.mxu0 0.0
      %1751 = vmatprep.subr.mxu0 0.0
      %1752 = vmatpush1.msra.mxu0 0.0
      %1753 = vmatprep.subr.mxu0 0.0
      %1754 = vmatpush1.msra.mxu0 0.0
      %1755 = vmatprep.subr.mxu0 0.0
      %1756 = vmatpush1.msra.mxu0 0.0
      %1757 = vmatprep.subr.mxu0 0.0
      %1758 = vmatpush1.msra.mxu0 0.0
      %1759 = vmatprep.subr.mxu0 0.0
      %1760 = vmatpush1.msra.mxu0 0.0
      %1761 = vmatprep.subr.mxu0 0.0
      %1762 = vmatpush1.msra.mxu0 0.0
      %1763 = vmatprep.subr.mxu0 0.0
      %1764 = vmatpush1.msra.mxu0 0.0
      %1765 = vmatprep.subr.mxu0 0.0
      %1766 = vmatpush1.msra.mxu0 0.0
      %1767 = vmatprep.subr.mxu0 0.0
      %1768 = vmatpush1.msra.mxu0 0.0
      %1769 = vmatprep.subr.mxu0 0.0
      %1770 = vmatpush1.msra.mxu0 0.0
      %1771 = vmatprep.subr.mxu0 0.0
      %1772 = vmatpush1.msra.mxu0 0.0
      %1773 = vmatprep.subr.mxu0 0.0
      %1774 = vmatpush1.msra.mxu0 0.0
      %1775 = vmatprep.subr.mxu0 0.0
      %1776 = vmatpush1.msra.mxu0 0.0
      %1777 = vmatprep.subr.mxu0 0.0
      %1778 = vmatpush1.msra.mxu0 0.0
      %1779 = vmatprep.subr.mxu0 0.0
      %1780 = vmatpush1.msra.mxu0 0.0
      %1781 = vmatprep.subr.mxu0 0.0
      %1782 = vmatpush1.msra.mxu0 0.0
      %1783 = vmatprep.subr.mxu0 0.0
      %1784 = vmatpush1.msra.mxu0 0.0
      %1785 = vmatprep.subr.mxu0 0.0
      %1786 = vmatpush1.msra.mxu0 0.0
      %1787 = vmatprep.mubr.f32.mxu0 0.0
      %1788 = vmatmul.mubr.f32.gmra.mrb[0].mxu0 %v1721
      %v1789 = vpop.f32.mrb[0].mxu0
      %v1790 = vadd.f32 0.0, %v1789
      %v1791 = vpop.f32.mrb[0].mxu0
      %v1792 = vadd.f32 0.0, %v1791
      %1793 = vdwg.mxu0
      %1794 = vrot.lane.b32.xlu0 %v670, 15
      %v1795 = vpop.permute.xlu0 %1794
      %1796 = vrot.lane.b32.xlu0 %v671, 15
      %v1797 = vpop.permute.xlu0 %1796
      %1798 = vrot.lane.b32.xlu0 %v672, 15
      %v1799 = vpop.permute.xlu0 %1798
      %1800 = vrot.lane.b32.xlu0 %v673, 15
      %v1801 = vpop.permute.xlu0 %1800
      %1802 = vrot.lane.b32.xlu0 %v674, 15
      %v1803 = vpop.permute.xlu0 %1802
      %1804 = vrot.lane.b32.xlu0 %v675, 15
      %v1805 = vpop.permute.xlu0 %1804
      %1806 = vrot.lane.b32.xlu0 %v676, 15
      %v1807 = vpop.permute.xlu0 %1806
      %1808 = vrot.lane.b32.xlu0 %v677, 15
      %v1809 = vpop.permute.xlu0 %1808
      %1810 = vrot.lane.b32.xlu0 %v678, 15
      %v1811 = vpop.permute.xlu0 %1810
      %1812 = vrot.lane.b32.xlu0 %v679, 15
      %v1813 = vpop.permute.xlu0 %1812
      %1814 = vrot.lane.b32.xlu0 %v680, 15
      %v1815 = vpop.permute.xlu0 %1814
      %1816 = vrot.lane.b32.xlu0 %v681, 15
      %v1817 = vpop.permute.xlu0 %1816
      %1818 = vrot.lane.b32.xlu0 %v682, 15
      %v1819 = vpop.permute.xlu0 %1818
      %1820 = vrot.lane.b32.xlu0 %v683, 15
      %v1821 = vpop.permute.xlu0 %1820
      %1822 = vrot.lane.b32.xlu0 %v684, 15
      %v1823 = vpop.permute.xlu0 %1822
      %1824 = vrot.lane.b32.xlu0 %v685, 15
      %v1825 = vpop.permute.xlu0 %1824
      %1826 = vrot.lane.b32.xlu0 %v686, 15
      %v1827 = vpop.permute.xlu0 %1826
      %1828 = vrot.lane.b32.xlu0 %v687, 15
      %v1829 = vpop.permute.xlu0 %1828
      %1830 = vrot.lane.b32.xlu0 %v688, 15
      %v1831 = vpop.permute.xlu0 %1830
      %1832 = vrot.lane.b32.xlu0 %v689, 15
      %v1833 = vpop.permute.xlu0 %1832
      %1834 = vrot.lane.b32.xlu0 %v690, 15
      %v1835 = vpop.permute.xlu0 %1834
      %1836 = vrot.lane.b32.xlu0 %v691, 15
      %v1837 = vpop.permute.xlu0 %1836
      %1838 = vrot.lane.b32.xlu0 %v692, 15
      %v1839 = vpop.permute.xlu0 %1838
      %1840 = vrot.lane.b32.xlu0 %v693, 15
      %v1841 = vpop.permute.xlu0 %1840
      %v1842 = vsel %vm286, %v1795, %v1797
      %v1843 = vsel %vm286, %v1797, %v1799
      %v1844 = vsel %vm286, %v1801, %v1803
      %v1845 = vsel %vm286, %v1803, %v1805
      %v1846 = vsel %vm286, %v1807, %v1809
      %v1847 = vsel %vm286, %v1809, %v1811
      %v1848 = vsel %vm286, %v1813, %v1815
      %v1849 = vsel %vm286, %v1815, %v1817
      %v1850 = vsel %vm286, %v1819, %v1821
      %v1851 = vsel %vm286, %v1821, %v1823
      %v1852 = vsel %vm286, %v1825, %v1827
      %v1853 = vsel %vm286, %v1827, %v1829
      %v1854 = vsel %vm286, %v1831, %v1833
      %v1855 = vsel %vm286, %v1833, %v1835
      %v1856 = vsel %vm286, %v1837, %v1839
      %v1857 = vsel %vm286, %v1839, %v1841
      %v1875 = vsel %vm801, %v1637, 0
      %1877 = vmatprep.subr.mxu0 %v1843
      %1878 = vmatpush1.msra.mxu0 %v1842
      %1879 = vmatprep.subr.mxu0 %v1845
      %1880 = vmatpush1.msra.mxu0 %v1844
      %1881 = vmatprep.subr.mxu0 %v1847
      %1882 = vmatpush1.msra.mxu0 %v1846
      %1883 = vmatprep.subr.mxu0 %v1849
      %1884 = vmatpush1.msra.mxu0 %v1848
      %1885 = vmatprep.subr.mxu0 %v1851
      %1886 = vmatpush1.msra.mxu0 %v1850
      %1887 = vmatprep.subr.mxu0 %v1853
      %1888 = vmatpush1.msra.mxu0 %v1852
      %1889 = vmatprep.subr.mxu0 %v1855
      %1890 = vmatpush1.msra.mxu0 %v1854
      %1891 = vmatprep.subr.mxu0 %v1857
      %1892 = vmatpush1.msra.mxu0 %v1856
      %1893 = vmatprep.subr.mxu0 0.0
      %1894 = vmatpush1.msra.mxu0 0.0
      %1895 = vmatprep.subr.mxu0 0.0
      %1896 = vmatpush1.msra.mxu0 0.0
      %1897 = vmatprep.subr.mxu0 0.0
      %1898 = vmatpush1.msra.mxu0 0.0
      %1899 = vmatprep.subr.mxu0 0.0
      %1900 = vmatpush1.msra.mxu0 0.0
      %1901 = vmatprep.subr.mxu0 0.0
      %1902 = vmatpush1.msra.mxu0 0.0
      %1903 = vmatprep.subr.mxu0 0.0
      %1904 = vmatpush1.msra.mxu0 0.0
      %1905 = vmatprep.subr.mxu0 0.0
      %1906 = vmatpush1.msra.mxu0 0.0
      %1907 = vmatprep.subr.mxu0 0.0
      %1908 = vmatpush1.msra.mxu0 0.0
      %1909 = vmatprep.subr.mxu0 0.0
      %1910 = vmatpush1.msra.mxu0 0.0
      %1911 = vmatprep.subr.mxu0 0.0
      %1912 = vmatpush1.msra.mxu0 0.0
      %1913 = vmatprep.subr.mxu0 0.0
      %1914 = vmatpush1.msra.mxu0 0.0
      %1915 = vmatprep.subr.mxu0 0.0
      %1916 = vmatpush1.msra.mxu0 0.0
      %1917 = vmatprep.subr.mxu0 0.0
      %1918 = vmatpush1.msra.mxu0 0.0
      %1919 = vmatprep.subr.mxu0 0.0
      %1920 = vmatpush1.msra.mxu0 0.0
      %1921 = vmatprep.subr.mxu0 0.0
      %1922 = vmatpush1.msra.mxu0 0.0
      %1923 = vmatprep.subr.mxu0 0.0
      %1924 = vmatpush1.msra.mxu0 0.0
      %1925 = vmatprep.subr.mxu0 0.0
      %1926 = vmatpush1.msra.mxu0 0.0
      %1927 = vmatprep.subr.mxu0 0.0
      %1928 = vmatpush1.msra.mxu0 0.0
      %1929 = vmatprep.subr.mxu0 0.0
      %1930 = vmatpush1.msra.mxu0 0.0
      %1931 = vmatprep.subr.mxu0 0.0
      %1932 = vmatpush1.msra.mxu0 0.0
      %1933 = vmatprep.subr.mxu0 0.0
      %1934 = vmatpush1.msra.mxu0 0.0
      %1935 = vmatprep.subr.mxu0 0.0
      %1936 = vmatpush1.msra.mxu0 0.0
      %1937 = vmatprep.subr.mxu0 0.0
      %1938 = vmatpush1.msra.mxu0 0.0
      %1939 = vmatprep.subr.mxu0 0.0
      %1940 = vmatpush1.msra.mxu0 0.0
      %1941 = vmatprep.mubr.f32.mxu0 0.0
      %1942 = vmatmul.mubr.f32.gmra.mrb[0].mxu0 %v1875
      %v1943 = vpop.f32.mrb[0].mxu0
      %v1944 = vadd.f32 %v1790, %v1943
      %v1945 = vpop.f32.mrb[0].mxu0
      %v1946 = vadd.f32 %v1792, %v1945
      %1947 = vdwg.mxu0
      %s1948 = scalar_lea.vmem %s3, 16
      %v1949 = vld [vmem:[%s1948] sm:$0x3]
      %1950 = vrot.lane.b32.xlu0 %v1030, 111
      %v1951 = vpop.permute.xlu0 %1950
      %1952 = vrot.lane.b32.xlu0 %v1031, 111
      %v1953 = vpop.permute.xlu0 %1952
      %1954 = vrot.lane.b32.xlu0 %v1032, 111
      %v1955 = vpop.permute.xlu0 %1954
      %1956 = vrot.lane.b32.xlu0 %v1033, 111
      %v1957 = vpop.permute.xlu0 %1956
      %1958 = vrot.lane.b32.xlu0 %v1034, 111
      %v1959 = vpop.permute.xlu0 %1958
      %1960 = vrot.lane.b32.xlu0 %v1035, 111
      %v1961 = vpop.permute.xlu0 %1960
      %1962 = vrot.lane.b32.xlu0 %v1036, 111
      %v1963 = vpop.permute.xlu0 %1962
      %1964 = vrot.lane.b32.xlu0 %v1037, 111
      %v1965 = vpop.permute.xlu0 %1964
      %1966 = vrot.lane.b32.xlu0 %v1038, 111
      %v1967 = vpop.permute.xlu0 %1966
      %1968 = vrot.lane.b32.xlu0 %v1039, 111
      %v1969 = vpop.permute.xlu0 %1968
      %1970 = vrot.lane.b32.xlu0 %v1040, 111
      %v1971 = vpop.permute.xlu0 %1970
      %1972 = vrot.lane.b32.xlu0 %v1041, 111
      %v1973 = vpop.permute.xlu0 %1972
      %1974 = vrot.lane.b32.xlu0 %v1042, 111
      %v1975 = vpop.permute.xlu0 %1974
      %1976 = vrot.lane.b32.xlu0 %v1043, 111
      %v1977 = vpop.permute.xlu0 %1976
      %1978 = vrot.lane.b32.xlu0 %v1044, 111
      %v1979 = vpop.permute.xlu0 %1978
      %1980 = vrot.lane.b32.xlu0 %v1045, 111
      %v1981 = vpop.permute.xlu0 %1980
      %1982 = vrot.lane.b32.xlu0 %v1046, 111
      %v1983 = vpop.permute.xlu0 %1982
      %1984 = vrot.lane.b32.xlu0 %v1047, 111
      %v1985 = vpop.permute.xlu0 %1984
      %1986 = vrot.lane.b32.xlu0 %v1048, 111
      %v1987 = vpop.permute.xlu0 %1986
      %1988 = vrot.lane.b32.xlu0 %v1049, 111
      %v1989 = vpop.permute.xlu0 %1988
      %1990 = vrot.lane.b32.xlu0 %v1050, 111
      %v1991 = vpop.permute.xlu0 %1990
      %1992 = vrot.lane.b32.xlu0 %v1051, 111
      %v1993 = vpop.permute.xlu0 %1992
      %1994 = vrot.lane.b32.xlu0 %v1052, 111
      %v1995 = vpop.permute.xlu0 %1994
      %1996 = vrot.lane.b32.xlu0 %v1053, 111
      %v1997 = vpop.permute.xlu0 %1996
      %v1998 = vsel %vm353, %v1951, %v1953
      %v1999 = vsel %vm353, %v1953, %v1955
      %v2000 = vsel %vm353, %v1957, %v1959
      %v2001 = vsel %vm353, %v1959, %v1961
      %v2002 = vsel %vm353, %v1963, %v1965
      %v2003 = vsel %vm353, %v1965, %v1967
      %v2004 = vsel %vm353, %v1969, %v1971
      %v2005 = vsel %vm353, %v1971, %v1973
      %v2006 = vsel %vm353, %v1975, %v1977
      %v2007 = vsel %vm353, %v1977, %v1979
      %v2008 = vsel %vm353, %v1981, %v1983
      %v2009 = vsel %vm353, %v1983, %v1985
      %v2010 = vsel %vm353, %v1987, %v1989
      %v2011 = vsel %vm353, %v1989, %v1991
      %v2012 = vsel %vm353, %v1993, %v1995
      %v2013 = vsel %vm353, %v1995, %v1997
      %v2031 = vsel %vm801, %v1949, 0
      %2033 = vmatprep.subr.mxu0 %v1999
      %2034 = vmatpush1.msra.mxu0 %v1998
      %2035 = vmatprep.subr.mxu0 %v2001
      %2036 = vmatpush1.msra.mxu0 %v2000
      %2037 = vmatprep.subr.mxu0 %v2003
      %2038 = vmatpush1.msra.mxu0 %v2002
      %2039 = vmatprep.subr.mxu0 %v2005
      %2040 = vmatpush1.msra.mxu0 %v2004
      %2041 = vmatprep.subr.mxu0 %v2007
      %2042 = vmatpush1.msra.mxu0 %v2006
      %2043 = vmatprep.subr.mxu0 %v2009
      %2044 = vmatpush1.msra.mxu0 %v2008
      %2045 = vmatprep.subr.mxu0 %v2011
      %2046 = vmatpush1.msra.mxu0 %v2010
      %2047 = vmatprep.subr.mxu0 %v2013
      %2048 = vmatpush1.msra.mxu0 %v2012
      %2049 = vmatprep.subr.mxu0 0.0
      %2050 = vmatpush1.msra.mxu0 0.0
      %2051 = vmatprep.subr.mxu0 0.0
      %2052 = vmatpush1.msra.mxu0 0.0
      %2053 = vmatprep.subr.mxu0 0.0
      %2054 = vmatpush1.msra.mxu0 0.0
      %2055 = vmatprep.subr.mxu0 0.0
      %2056 = vmatpush1.msra.mxu0 0.0
      %2057 = vmatprep.subr.mxu0 0.0
      %2058 = vmatpush1.msra.mxu0 0.0
      %2059 = vmatprep.subr.mxu0 0.0
      %2060 = vmatpush1.msra.mxu0 0.0
      %2061 = vmatprep.subr.mxu0 0.0
      %2062 = vmatpush1.msra.mxu0 0.0
      %2063 = vmatprep.subr.mxu0 0.0
      %2064 = vmatpush1.msra.mxu0 0.0
      %2065 = vmatprep.subr.mxu0 0.0
      %2066 = vmatpush1.msra.mxu0 0.0
      %2067 = vmatprep.subr.mxu0 0.0
      %2068 = vmatpush1.msra.mxu0 0.0
      %2069 = vmatprep.subr.mxu0 0.0
      %2070 = vmatpush1.msra.mxu0 0.0
      %2071 = vmatprep.subr.mxu0 0.0
      %2072 = vmatpush1.msra.mxu0 0.0
      %2073 = vmatprep.subr.mxu0 0.0
      %2074 = vmatpush1.msra.mxu0 0.0
      %2075 = vmatprep.subr.mxu0 0.0
      %2076 = vmatpush1.msra.mxu0 0.0
      %2077 = vmatprep.subr.mxu0 0.0
      %2078 = vmatpush1.msra.mxu0 0.0
      %2079 = vmatprep.subr.mxu0 0.0
      %2080 = vmatpush1.msra.mxu0 0.0
      %2081 = vmatprep.subr.mxu0 0.0
      %2082 = vmatpush1.msra.mxu0 0.0
      %2083 = vmatprep.subr.mxu0 0.0
      %2084 = vmatpush1.msra.mxu0 0.0
      %2085 = vmatprep.subr.mxu0 0.0
      %2086 = vmatpush1.msra.mxu0 0.0
      %2087 = vmatprep.subr.mxu0 0.0
      %2088 = vmatpush1.msra.mxu0 0.0
      %2089 = vmatprep.subr.mxu0 0.0
      %2090 = vmatpush1.msra.mxu0 0.0
      %2091 = vmatprep.subr.mxu0 0.0
      %2092 = vmatpush1.msra.mxu0 0.0
      %2093 = vmatprep.subr.mxu0 0.0
      %2094 = vmatpush1.msra.mxu0 0.0
      %2095 = vmatprep.subr.mxu0 0.0
      %2096 = vmatpush1.msra.mxu0 0.0
      %2097 = vmatprep.mubr.f32.mxu0 0.0
      %2098 = vmatmul.mubr.f32.gmra.mrb[0].mxu0 %v2031
      %v2099 = vpop.f32.mrb[0].mxu0
      %v2100 = vadd.f32 0.0, %v2099
      %v2101 = vpop.f32.mrb[0].mxu0
      %v2102 = vadd.f32 0.0, %v2101
      %2103 = vdwg.mxu0
      %v2104 = vadd.f32 %v1944, %v2100
      %v2105 = vadd.f32 %v1946, %v2102
      %v2106 = vsel %vm251, 1, 0
      %v2107 = vsel %vm252, 1, 0
      %vm2108 = vcmp.eq.s32.totalorder %v2106, 1
      %vm2109 = vcmp.eq.s32.totalorder %v2107, 1
      %v2110 = vsel %vm2108, %v2104, 0.0
      %v2111 = vsel %vm2109, %v2105, 0.0
      %v2112 = vadd.f32 %v1634, %v2110
      %v2113 = vadd.f32 %v1635, %v2111
      %v2114 = vld [vmem:[%s4] sm:$0x3]
      %2116 = vset.pattern.permute.xlu0 0
      %2117 = vperm.xlu0 %2116, %v2114
      %v2118 = vpop.permute.xlu0 %2117
      %v2120 = vadd.f32 %v2112, %v2118
      %v2121 = vadd.f32 %v2113, %v2118
      %v2122 = vtanh.pop %v2120
      %v2123 = vtanh.pop %v2121
      %v2126 = vcombine.low %v2122, %v2123
      %v2128 = vunpack.c.l.s4 1983009808
      %v2129 = vunpack.c.0.s8 %v2128
      %v2130 = vlaneseq
      %v2131 = vshrl.u32 %v2130, 7
      %v2132 = vsub.s32 %v2129, %v2131
      %v2133 = vrot.slane %v2126, %v2132
      %2135 = vst [vmem:[%s221] sm:$0xf] %v2133
      %p2136 = scmp.lt.s32.totalorder %s16, 1
      %s2137 = scalar_select %p2136, %s16, 1
      %s2138 = smul.addr %s2137, 2
      %s2139 = smul.addr %s2138, 2
      %s2140 = scalar_lea.vmem %s5, %s2139
      // Predicated region
      $region41: #{model_tanh_pallas.1} parent=39 // pred_check
        %p2141 = pneg %p144
      $region42: #{model_tanh_pallas.1} parent=39 // pred_check_branch
        %2143 = sbr.rel (%p2141) target = $region44
      $region43: #{model_tanh_pallas.1} parent=39 // pred_region
        _
      $region44: #{model_tanh_pallas.1} parent=39 // pred_fallthru
        _
    $region40: #{model_tanh_pallas.1} parent=5 // pred_fallthru
      _
    %p2144 = scmp.le.s32.totalorder 2, %s11
    // Predicated region
    $region45: #{model_tanh_pallas.1} parent=5 // pred_check
      %p2145 = pneg %p2144
    $region46: #{model_tanh_pallas.1} parent=5 // pred_check_branch
      %2147 = sbr.rel (%p2145) target = $region48
    $region47: #{model_tanh_pallas.1} parent=5 // pred_region
      %s2148 = ssub.s32 %s11, 2
      // Predicated region
      $region49: #{model_tanh_pallas.1} parent=47 // pred_check
        %p2149 = pneg %p150
      $region50: #{model_tanh_pallas.1} parent=47 // pred_check_branch
        %2151 = sbr.rel (%p2149) target = $region52
      $region51: #{model_tanh_pallas.1} parent=47 // pred_region
        %p2152 = scmp.lt.s32.totalorder %s17, 1
        %s2153 = scalar_select %p2152, %s17, 1
        %s2154 = smul.addr %s2153, 2
        %s2155 = smul.addr %s2154, 2
        %s2156 = scalar_lea.vmem %s5, %s2155
      $region52: #{model_tanh_pallas.1} parent=47 // pred_fallthru
        _
    $region48: #{model_tanh_pallas.1} parent=5 // pred_fallthru
      _
  $region6: #{model_tanh_pallas.1} parent=0 // loop_footer
    %s15 = sadd.s32 1, %s11
  $region7: #{model_tanh_pallas.1} parent=0 // loop_footer_branch
    %10 = sbr.rel target = $region3
  $region8: #{model_tanh_pallas.1} parent=0 // loop_exit
    _

</llo_original>
